<compile_context>
chip_gen: v5e
topology: v5e:2x2
jax: 0.10.0
libtpu: 0.0.40
codegen_flags: <defaults>
</compile_context>

<pallas_src>
import jax
import jax.numpy as jnp
import numpy as np
from jax.experimental import pallas as pl
from jax.experimental.pallas import tpu as pltpu


# --------------------------------------------------------------------------
# Kernel: one (row-tile, out-col-tile) block of  sin(x @ Wt + b)
# (w0 is already folded into Wt and b by prepare_siren_params).
# --------------------------------------------------------------------------
def _siren_kernel(x_ref, wt_ref, b_ref, o_ref):
    x = x_ref[...]                      # (TILE_N, dim_in)
    w = wt_ref[...]                     # (dim_in, TILE_OUT)
    if x.dtype != w.dtype:              # bf16-weight path: bf16 MXU, f32 accumulate
        x = x.astype(w.dtype)
    z = jnp.dot(x, w, preferred_element_type=jnp.float32)
    z = z + b_ref[...]                  # (1, TILE_OUT) broadcast over rows
    o_ref[...] = jnp.sin(z).astype(o_ref.dtype)


# --------------------------------------------------------------------------
# Parameter init (matches the PyTorch module's init_) and one-time prep.
# --------------------------------------------------------------------------
def init_siren_params(key, dim_in, dim_out, w0=1.0, c=6.0, is_first=False):
    w_std = (1.0 / dim_in) if is_first else (float(np.sqrt(c / dim_in)) / w0)
    kw, kb = jax.random.split(key)
    weight = jax.random.uniform(kw, (dim_out, dim_in), jnp.float32, -w_std, w_std)
    bias = jax.random.uniform(kb, (dim_out,), jnp.float32, -w_std, w_std)
    return weight, bias


def prepare_siren_params(weight, bias=None, *, w0=1.0, weight_dtype=jnp.float32):
    """One-time prep: fold w0 into the params and transpose the weight.

    weight: (dim_out, dim_in), bias: (dim_out,) or None.
    Returns (wt, b2d):
      wt  : (dim_in, dim_out) in weight_dtype (f32 default, bf16 optional)
      b2d : (1, dim_out)      f32
    """
    dim_out, dim_in = weight.shape
    wt = (jnp.asarray(weight, jnp.float32) * float(w0)).T.astype(weight_dtype)
    if bias is not None:
        b = jnp.asarray(bias, jnp.float32) * float(w0)
    else:
        b = jnp.zeros((dim_out,), jnp.float32)
    return wt, b.reshape(1, dim_out)


# --------------------------------------------------------------------------
# Generation-aware VMEM planning and tile selection.
# --------------------------------------------------------------------------
def _vmem_capacity_bytes():
    try:
        cap = int(pltpu.get_tpu_info().vmem_capacity_bytes)
        if cap > 0:
            return cap
    except Exception:
        pass
    try:
        kind = jax.devices()[0].device_kind.lower()
        if "v7" in kind or "tpu7" in kind:
            return 64 * 1024 * 1024
    except Exception:
        pass
    return 128 * 1024 * 1024


def _vmem_plan():
    cap = _vmem_capacity_bytes()
    # Leave headroom for Mosaic internal scratch / semaphores / misc buffers.
    limit = max(32 * 1024 * 1024, cap - 16 * 1024 * 1024)    # v7x: 48 MiB, v5e/v6e: 112 MiB
    budget = max(24 * 1024 * 1024, limit - 10 * 1024 * 1024)  # planning budget
    return limit, budget


def _round_up(x, m):
    return (x + m - 1) // m * m


def _choose_tiles(n, dim_in, dim_out, w_itemsize, out_itemsize, budget,
                  tile_n=None, tile_out=None):
    n8 = max(8, _round_up(n, 8))

    # Output-column tile: keep the whole transposed weight resident when it
    # comfortably fits; otherwise tile dim_out in multiples of 128.
    if tile_out is None:
        w_col_bytes = dim_in * w_itemsize
        if dim_out <= 128 or 2 * dim_out * w_col_bytes <= budget // 2:
            tile_out = dim_out
        else:
            tile_out = ((budget // 2) // (2 * w_col_bytes * 128)) * 128
            tile_out = int(max(128, min(tile_out, _round_up(dim_out, 128))))
    grid_out = pl.cdiv(dim_out, tile_out)

    # Row tile: biggest multiple of 8 (<= 2048) fitting the remaining budget.
    if tile_n is None:
        fixed = 2 * dim_in * tile_out * w_itemsize + 2 * tile_out * 4   # weight + bias
        per_row = 2 * dim_in * 4 + 2 * tile_out * out_itemsize          # x + out, dbl-buffered
        tile_n = (budget - fixed) // max(per_row, 1)
        tile_n = int(min(tile_n, 2048, n8))
        tile_n = max(8, (tile_n // 8) * 8)
        # Guarantee >= 2 grid steps when possible so megacore (v7x) can shard.
        if grid_out == 1 and tile_n >= n8 and n8 >= 16:
            tile_n = max(8, ((n8 // 2) // 8) * 8)
    else:
        tile_n = max(8, (int(tile_n) // 8) * 8)
    grid_n = pl.cdiv(n, tile_n)
    return int(tile_n), int(tile_out), int(grid_n), int(grid_out)


# --------------------------------------------------------------------------
# pallas_call builder + wrapper
# --------------------------------------------------------------------------
def _build_call(n, dim_in, dim_out, tile_n, tile_out, grid_n, grid_out,
                out_dtype, vmem_limit, cost, single_buffer_weight):
    w_kwargs = {}
    if single_buffer_weight and hasattr(pl, "Buffered"):
        # Weight/bias block index is constant over the whole grid -> resident;
        # one VMEM buffer suffices (saves VMEM vs. the default double buffer).
        w_kwargs = {"pipeline_mode": pl.Buffered(1)}

    grid_spec = pltpu.PrefetchScalarGridSpec(
        num_scalar_prefetch=0,
        grid=(grid_n, grid_out),
        in_specs=[
            pl.BlockSpec((tile_n, dim_in), lambda i, j: (i, 0)),
            pl.BlockSpec((dim_in, tile_out), lambda i, j: (0, j), **w_kwargs),
            pl.BlockSpec((1, tile_out), lambda i, j: (0, j), **w_kwargs),
        ],
        out_specs=pl.BlockSpec((tile_n, tile_out), lambda i, j: (i, j)),
    )
    return pl.pallas_call(
        _siren_kernel,
        out_shape=jax.ShapeDtypeStruct((n, dim_out), out_dtype),
        grid_spec=grid_spec,
        compiler_params=pltpu.CompilerParams(
            dimension_semantics=("parallel", "parallel"),
            vmem_limit_bytes=int(vmem_limit),
        ),
        cost_estimate=cost,
    )


def siren_layer(x, wt, b2d, *, out_dtype=jnp.float32, tile_n=None, tile_out=None):
    """Forward of SirenLayer: sin(w0 * (x @ W^T + b)), with w0 pre-folded into
    (wt, b2d) by prepare_siren_params.  x: (..., dim_in)."""
    dim_in, dim_out = wt.shape
    assert x.shape[-1] == dim_in, (x.shape, dim_in)
    lead_shape = x.shape[:-1]

    x2d = x if x.dtype == jnp.float32 else x.astype(jnp.float32)
    x2d = x2d.reshape(-1, dim_in)
    n = x2d.shape[0]

    vmem_limit, budget = _vmem_plan()
    tile_n, tile_out, grid_n, grid_out = _choose_tiles(
        n, dim_in, dim_out, wt.dtype.itemsize, jnp.dtype(out_dtype).itemsize,
        budget, tile_n=tile_n, tile_out=tile_out)

    w_reads = grid_n if grid_out > 1 else 1
    cost = pl.CostEstimate(
        flops=2 * n * dim_in * dim_out,
        transcendentals=n * dim_out,
        bytes_accessed=(4 * n * dim_in
                        + wt.dtype.itemsize * dim_in * dim_out * w_reads
                        + jnp.dtype(out_dtype).itemsize * n * dim_out
                        + 4 * dim_out),
    )

    single_buf = (grid_out == 1)
    try:
        call = _build_call(n, dim_in, dim_out, tile_n, tile_out, grid_n, grid_out,
                           out_dtype, vmem_limit, cost,
                           single_buffer_weight=single_buf)
        out = call(x2d, wt, b2d)
    except Exception:
        if not single_buf:
            raise
        # Fallback: default double-buffered weight/bias (always supported).
        call = _build_call(n, dim_in, dim_out, tile_n, tile_out, grid_n, grid_out,
                           out_dtype, vmem_limit, cost,
                           single_buffer_weight=False)
        out = call(x2d, wt, b2d)

    return out.reshape(*lead_shape, dim_out)


# --------------------------------------------------------------------------
# Demo / correctness check
# --------------------------------------------------------------------------
if __name__ == "__main__":
    key = jax.random.PRNGKey(0)
    k_x, k_p, k_x2, k_p2 = jax.random.split(key, 4)

    # --- Test 1: first SIREN layer (small coordinate batch, tiny dim_out) ---
    lead = (4, 16)                    # 64 coordinate rows
    dim_in, dim_out, w0 = 32, 32, 30.0
    x = jax.random.uniform(k_x, (*lead, dim_in), jnp.float32, -1.0, 1.0)
    weight, bias = init_siren_params(k_p, dim_in, dim_out, w0=w0, c=6.0, is_first=True)
    wt, b2d = prepare_siren_params(weight, bias, w0=w0)

    y = siren_layer(x, wt, b2d)
    jax.block_until_ready(y)

    y_ref = jnp.sin(w0 * (x.reshape(-1, dim_in) @ weight.T + bias))
    y_ref = y_ref.reshape(*lead, dim_out)
    np.testing.assert_allclose(np.asarray(y), np.asarray(y_ref),
                               rtol=1e-4, atol=1e-4)

    # --- Test 2: hidden layer exercising output-column tiling + boundary ---
    lead2 = (3, 8)                    # 24 rows
    d_in2, d_out2, w0h = 48, 272, 1.0
    x2 = jax.random.uniform(k_x2, (*lead2, d_in2), jnp.float32, -1.0, 1.0)
    w2, b2 = init_siren_params(k_p2, d_in2, d_out2, w0=w0h, c=6.0, is_first=False)
    wt2, b2d2 = prepare_siren_params(w2, b2, w0=w0h)

    y2 = siren_layer(x2, wt2, b2d2, tile_out=128)     # forces grid_out > 1
    jax.block_until_ready(y2)

    y2_ref = jnp.sin(w0h * (x2.reshape(-1, d_in2) @ w2.T + b2))
    y2_ref = y2_ref.reshape(*lead2, d_out2)
    np.testing.assert_allclose(np.asarray(y2), np.asarray(y2_ref),
                               rtol=1e-4, atol=1e-4)

    print("KERNEL_OK")
</pallas_src>

<mosaic_0001>
module attributes {stable_mosaic.version = 11 : i64} {
  func.func @_siren_kernel(%arg0: i32, %arg1: i32, %arg2: memref<32x32xf32, #tpu.memory_space<vmem>>, %arg3: memref<32x32xf32, #tpu.memory_space<vmem>>, %arg4: memref<1x32xf32, #tpu.memory_space<vmem>>, %arg5: memref<32x32xf32, #tpu.memory_space<vmem>>) attributes {dimension_semantics = [#tpu.dimension_semantics<parallel>, #tpu.dimension_semantics<parallel>], iteration_bounds = array<i64: 2, 1>, scalar_prefetch = 0 : i64, scratch_operands = 0 : i64, tpu.core_type = #tpu.core_type<tc>, window_params = [{transform_indices = @transform_0, window_bounds = array<i64: 32, 32>}, {pipeline_mode = #tpu.pipeline_mode<synchronous>, transform_indices = @transform_1, window_bounds = array<i64: 32, 32>}, {pipeline_mode = #tpu.pipeline_mode<synchronous>, transform_indices = @transform_2, window_bounds = array<i64: 1, 32>}, {transform_indices = @transform_3, window_bounds = array<i64: 32, 32>}]} {
    %c0 = arith.constant 0 : index
    %c0_0 = arith.constant 0 : index
    %0 = vector.load %arg2[%c0, %c0_0] : memref<32x32xf32, #tpu.memory_space<vmem>>, vector<32x32xf32>
    %c0_1 = arith.constant 0 : index
    %c0_2 = arith.constant 0 : index
    %1 = vector.load %arg3[%c0_1, %c0_2] : memref<32x32xf32, #tpu.memory_space<vmem>>, vector<32x32xf32>
    %cst = arith.constant dense<0.000000e+00> : vector<32x32xf32>
    %2 = tpu.matmul %0, %1, %cst {dimension_numbers = #tpu.dot_dimension_numbers<[1], [0], [0], [1], [0, 0, 1, 1], [], []>} : vector<32x32xf32>, vector<32x32xf32>, vector<32x32xf32> -> vector<32x32xf32>
    %c0_3 = arith.constant 0 : index
    %c0_4 = arith.constant 0 : index
    %3 = vector.load %arg4[%c0_3, %c0_4] : memref<1x32xf32, #tpu.memory_space<vmem>>, vector<1x32xf32>
    %4 = vector.broadcast %3 : vector<1x32xf32> to vector<32x32xf32>
    %5 = arith.addf %2, %4 : vector<32x32xf32>
    %6 = math.sin %5 : vector<32x32xf32>
    %c0_5 = arith.constant 0 : index
    %c0_6 = arith.constant 0 : index
    %7 = vector.load %arg5[%c0_5, %c0_6] : memref<32x32xf32, #tpu.memory_space<vmem>>, vector<32x32xf32>
    tpu.vector_store %arg5[%c0_5, %c0_6], %6 {strides = array<i32>} : memref<32x32xf32, #tpu.memory_space<vmem>>, vector<32x32xf32>,
    return
  }
  func.func @transform_0(%arg0: i32, %arg1: i32) -> (i32, i32) {
    %c0_i32 = arith.constant 0 : i32
    %c0_i32_0 = arith.constant 0 : i32
    return %arg0, %c0_i32 : i32, i32
  }
  func.func @transform_1(%arg0: i32, %arg1: i32) -> (i32, i32) {
    %c0_i32 = arith.constant 0 : i32
    %c0_i32_0 = arith.constant 0 : i32
    return %c0_i32, %arg1 : i32, i32
  }
  func.func @transform_2(%arg0: i32, %arg1: i32) -> (i32, i32) {
    %c0_i32 = arith.constant 0 : i32
    %c0_i32_0 = arith.constant 0 : i32
    return %c0_i32, %arg1 : i32, i32
  }
  func.func @transform_3(%arg0: i32, %arg1: i32) -> (i32, i32) {
    %c0_i32 = arith.constant 0 : i32
    return %arg0, %arg1 : i32, i32
  }
}

module attributes {stable_mosaic.version = 11 : i64} {
  func.func @_siren_kernel(%arg0: i32, %arg1: i32, %arg2: memref<32x32xf32, #tpu.memory_space<vmem>>, %arg3: memref<32x32xf32, #tpu.memory_space<vmem>>, %arg4: memref<1x32xf32, #tpu.memory_space<vmem>>, %arg5: memref<32x32xf32, #tpu.memory_space<vmem>>) attributes {dimension_semantics = [#tpu.dimension_semantics<parallel>, #tpu.dimension_semantics<parallel>], iteration_bounds = array<i64: 2, 1>, scalar_prefetch = 0 : i64, scratch_operands = 0 : i64, tpu.core_type = #tpu.core_type<tc>, window_params = [{transform_indices = @transform_0, window_bounds = array<i64: 32, 32>}, {transform_indices = @transform_1, window_bounds = array<i64: 32, 32>}, {transform_indices = @transform_2, window_bounds = array<i64: 1, 32>}, {transform_indices = @transform_3, window_bounds = array<i64: 32, 32>}]} {
    %c0 = arith.constant 0 : index
    %c0_0 = arith.constant 0 : index
    %0 = vector.load %arg2[%c0, %c0_0] : memref<32x32xf32, #tpu.memory_space<vmem>>, vector<32x32xf32>
    %c0_1 = arith.constant 0 : index
    %c0_2 = arith.constant 0 : index
    %1 = vector.load %arg3[%c0_1, %c0_2] : memref<32x32xf32, #tpu.memory_space<vmem>>, vector<32x32xf32>
    %cst = arith.constant dense<0.000000e+00> : vector<32x32xf32>
    %2 = tpu.matmul %0, %1, %cst {dimension_numbers = #tpu.dot_dimension_numbers<[1], [0], [0], [1], [0, 0, 1, 1], [], []>} : vector<32x32xf32>, vector<32x32xf32>, vector<32x32xf32> -> vector<32x32xf32>
    %c0_3 = arith.constant 0 : index
    %c0_4 = arith.constant 0 : index
    %3 = vector.load %arg4[%c0_3, %c0_4] : memref<1x32xf32, #tpu.memory_space<vmem>>, vector<1x32xf32>
    %4 = vector.broadcast %3 : vector<1x32xf32> to vector<32x32xf32>
    %5 = arith.addf %2, %4 : vector<32x32xf32>
    %6 = math.sin %5 : vector<32x32xf32>
    %c0_5 = arith.constant 0 : index
    %c0_6 = arith.constant 0 : index
    %7 = vector.load %arg5[%c0_5, %c0_6] : memref<32x32xf32, #tpu.memory_space<vmem>>, vector<32x32xf32>
    tpu.vector_store %arg5[%c0_5, %c0_6], %6 {strides = array<i32>} : memref<32x32xf32, #tpu.memory_space<vmem>>, vector<32x32xf32>,
    return
  }
  func.func @transform_0(%arg0: i32, %arg1: i32) -> (i32, i32) {
    %c0_i32 = arith.constant 0 : i32
    %c0_i32_0 = arith.constant 0 : i32
    return %arg0, %c0_i32 : i32, i32
  }
  func.func @transform_1(%arg0: i32, %arg1: i32) -> (i32, i32) {
    %c0_i32 = arith.constant 0 : i32
    %c0_i32_0 = arith.constant 0 : i32
    return %c0_i32, %arg1 : i32, i32
  }
  func.func @transform_2(%arg0: i32, %arg1: i32) -> (i32, i32) {
    %c0_i32 = arith.constant 0 : i32
    %c0_i32_0 = arith.constant 0 : i32
    return %c0_i32, %arg1 : i32, i32
  }
  func.func @transform_3(%arg0: i32, %arg1: i32) -> (i32, i32) {
    %c0_i32 = arith.constant 0 : i32
    return %arg0, %arg1 : i32, i32
  }
}

</mosaic_0001>

<llo_original>
// kernel: tpu_custom_call.1
$region0: #{tpu_custom_call.1}
  #allocation0 [shape = 'u32[]', space=smem, size = 0x4, offset = 0x4, fixed_abs, tag = 'smem constant byte address 0x4 - core index']
  #allocation1 [shape = 'u32[72,128]{1,0:T(1,128)}', space=vmem, size = 0x9000, scoped, tag = 'internal scratch']
  %s0 = inlined_call_operand.vmem [shape: f32[64,32], index: 0, kind: input, shape index: {}]
  %s1 = inlined_call_operand.vmem [shape: f32[32,32], index: 1, kind: input, shape index: {}]
  %s2 = inlined_call_operand.vmem [shape: f32[1,32], index: 2, kind: input, shape index: {}]
  %s3 = inlined_call_operand.vmem [shape: f32[64,32], index: 3, kind: output, shape index: {}]
  %s4 = sld [smem:[#allocation0]]
  $region45: #{tpu_custom_call.1} parent=0
    _
  %s6 = ssub.s32 1, %s4
  %s7 = scalar_select 0, %s6, %s4
  loop: start=0, step=1, limit=4
  $region2: #{tpu_custom_call.1} parent=0 // loop_pre_header
    _
  $region3: #{tpu_custom_call.1} parent=0 // loop_header
    %s9 = sphi 0, %s13
    %p10 = scmp.ge.s32.totalorder %s9, 4
    %s16 = sphi 0, %s28
    %s17 = sphi 0, %s24
    %s18 = sphi 0, %s16
    %s19 = sphi 0, %s17
    %s20 = sphi 0, %s18
    %s21 = sphi 0, %s19
    %s31 = sphi 0, %s33
    %s34 = sphi 0, %s31
    %s35 = sphi 0, %s34
    %s51 = sphi 0, %s35
    %s57 = sphi 0, %s59
    %s60 = sphi 0, %s57
    %s61 = sphi 0, %s60
    %s77 = sphi 0, %s61
    %s83 = sphi 0, %s85
    %s86 = sphi 0, %s83
    %s87 = sphi 0, %s86
    %s103 = sphi 0, %s87
    %s111 = sphi 0, %s113
    %s114 = sphi 0, %s111
    %s115 = sphi 0, %s114
    %s131 = sphi 0, %s115
  $region4: #{tpu_custom_call.1} parent=0 // loop_header_branch
    %12 = sbr.rel (%p10) target = $region8
  $region5: #{tpu_custom_call.1} parent=0 // loop_body
    %s14 = ssub.s32 %s9, 1
    %s15 = ssub.s32 %s9, 2
    %s22 = sadd.s32 1, %s17
    %p23 = scmp.ge.s32.totalorder %s22, 1
    %s24 = scalar_select %p23, 0, %s22
    %s25 = sadd.s32 1, %s16
    %s26 = scalar_select %p23, %s25, %s16
    %p27 = scmp.ge.s32.totalorder %s26, 2
    %s28 = scalar_select %p27, 0, %s26
    %s29 = ssub.s32 %s16, %s28
    %p30 = scmp.eq.s32.totalorder %s29, 0
    %s32 = sadd.s32 %s31, 1
    %s33 = scalar_select %p30, %s31, %s32
    %p36 = pneg %p30
    %p37 = scmp.eq.s32.totalorder %s9, 1
    %p38 = por %p36, %p37
    %p39 = scmp.ne.s32.totalorder %s31, %s34
    %p40 = scmp.eq.s32.totalorder %s9, 0
    %p41 = por %p39, %p40
    %p42 = scmp.ne.s32.totalorder %s31, %s34
    %p43 = scmp.eq.s32.totalorder %s14, 1
    %p44 = por %p42, %p43
    %p45 = scmp.ne.s32.totalorder %s34, %s35
    %p46 = scmp.eq.s32.totalorder %s14, 0
    %p47 = por %p45, %p46
    %p48 = scmp.ne.s32.totalorder %s34, %s35
    %p49 = scmp.eq.s32.totalorder %s15, 1
    %p50 = por %p48, %p49
    %p52 = scmp.ne.s32.totalorder %s35, %s51
    %p53 = scmp.eq.s32.totalorder %s15, 0
    %p54 = por %p52, %p53
    %s55 = ssub.s32 %s17, %s24
    %p56 = scmp.eq.s32.totalorder %s55, 0
    %s58 = sadd.s32 %s57, 1
    %s59 = scalar_select %p56, %s57, %s58
    %p62 = pneg %p56
    %p63 = scmp.eq.s32.totalorder %s9, 1
    %p64 = por %p62, %p63
    %p65 = scmp.ne.s32.totalorder %s57, %s60
    %p66 = scmp.eq.s32.totalorder %s9, 0
    %p67 = por %p65, %p66
    %p68 = scmp.ne.s32.totalorder %s57, %s60
    %p69 = scmp.eq.s32.totalorder %s14, 1
    %p70 = por %p68, %p69
    %p71 = scmp.ne.s32.totalorder %s60, %s61
    %p72 = scmp.eq.s32.totalorder %s14, 0
    %p73 = por %p71, %p72
    %p74 = scmp.ne.s32.totalorder %s60, %s61
    %p75 = scmp.eq.s32.totalorder %s15, 1
    %p76 = por %p74, %p75
    %p78 = scmp.ne.s32.totalorder %s61, %s77
    %p79 = scmp.eq.s32.totalorder %s15, 0
    %p80 = por %p78, %p79
    %s81 = ssub.s32 %s17, %s24
    %p82 = scmp.eq.s32.totalorder %s81, 0
    %s84 = sadd.s32 %s83, 1
    %s85 = scalar_select %p82, %s83, %s84
    %p88 = pneg %p82
    %p89 = scmp.eq.s32.totalorder %s9, 1
    %p90 = por %p88, %p89
    %p91 = scmp.ne.s32.totalorder %s83, %s86
    %p92 = scmp.eq.s32.totalorder %s9, 0
    %p93 = por %p91, %p92
    %p94 = scmp.ne.s32.totalorder %s83, %s86
    %p95 = scmp.eq.s32.totalorder %s14, 1
    %p96 = por %p94, %p95
    %p97 = scmp.ne.s32.totalorder %s86, %s87
    %p98 = scmp.eq.s32.totalorder %s14, 0
    %p99 = por %p97, %p98
    %p100 = scmp.ne.s32.totalorder %s86, %s87
    %p101 = scmp.eq.s32.totalorder %s15, 1
    %p102 = por %p100, %p101
    %p104 = scmp.ne.s32.totalorder %s87, %s103
    %p105 = scmp.eq.s32.totalorder %s15, 0
    %p106 = por %p104, %p105
    %s107 = ssub.s32 %s16, %s28
    %s108 = ssub.s32 %s17, %s24
    %s109 = sor.u32 %s107, %s108
    %p110 = scmp.eq.s32.totalorder %s109, 0
    %s112 = sadd.s32 %s111, 1
    %s113 = scalar_select %p110, %s111, %s112
    %p116 = pneg %p110
    %p117 = scmp.eq.s32.totalorder %s9, 1
    %p118 = por %p116, %p117
    %p119 = scmp.ne.s32.totalorder %s111, %s114
    %p120 = scmp.eq.s32.totalorder %s9, 0
    %p121 = por %p119, %p120
    %p122 = scmp.ne.s32.totalorder %s111, %s114
    %p123 = scmp.eq.s32.totalorder %s14, 1
    %p124 = por %p122, %p123
    %p125 = scmp.ne.s32.totalorder %s114, %s115
    %p126 = scmp.eq.s32.totalorder %s14, 0
    %p127 = por %p125, %p126
    %p128 = scmp.ne.s32.totalorder %s114, %s115
    %p129 = scmp.eq.s32.totalorder %s15, 1
    %p130 = por %p128, %p129
    %p132 = scmp.ne.s32.totalorder %s115, %s131
    %p133 = scmp.eq.s32.totalorder %s15, 0
    %p134 = por %p132, %p133
    %p135 = scmp.le.s32.totalorder 1, %s9
    %p136 = scmp.lt.s32.totalorder %s9, 3
    %p137 = pnand %p135, %p136
    %p138 = pneg %p137
    // Predicated region
    $region9: #{tpu_custom_call.1} parent=5 // pred_check
      _
    $region10: #{tpu_custom_call.1} parent=5 // pred_check_branch
      %140 = sbr.rel (%p137) target = $region12
    $region11: #{tpu_custom_call.1} parent=5 // pred_region
      %s141 = ssub.s32 %s9, 1
      // Predicated region
      $region13: #{tpu_custom_call.1} parent=11 // pred_check
        %p142 = pneg %p73
      $region14: #{tpu_custom_call.1} parent=11 // pred_check_branch
        %144 = sbr.rel (%p142) target = $region16
      $region15: #{tpu_custom_call.1} parent=11 // pred_region
        %p145 = scmp.lt.s32.totalorder %s19, 0
        %s146 = scalar_select %p145, %s19, 0
        %s147 = smul.addr %s146, 8
        %s148 = scalar_lea.vmem %s1, %s147
      $region16: #{tpu_custom_call.1} parent=11 // pred_fallthru
        _
      // Predicated region
      $region17: #{tpu_custom_call.1} parent=11 // pred_check
        %p149 = pneg %p99
      $region18: #{tpu_custom_call.1} parent=11 // pred_check_branch
        %151 = sbr.rel (%p149) target = $region20
      $region19: #{tpu_custom_call.1} parent=11 // pred_region
        %p152 = scmp.lt.s32.totalorder %s19, 0
        %s153 = scalar_select %p152, %s19, 0
        %s154 = scalar_lea.vmem %s2, %s153
      $region20: #{tpu_custom_call.1} parent=11 // pred_fallthru
        _
    $region12: #{tpu_custom_call.1} parent=5 // pred_fallthru
      _
    %p155 = scmp.lt.s32.totalorder %s9, 2
    // Predicated region
    $region21: #{tpu_custom_call.1} parent=5 // pred_check
      %p156 = pneg %p155
    $region22: #{tpu_custom_call.1} parent=5 // pred_check_branch
      %158 = sbr.rel (%p156) target = $region24
    $region23: #{tpu_custom_call.1} parent=5 // pred_region
      // Predicated region
      $region25: #{tpu_custom_call.1} parent=23 // pred_check
        %p159 = pneg %p41
      $region26: #{tpu_custom_call.1} parent=23 // pred_check_branch
        %161 = sbr.rel (%p159) target = $region28
      $region27: #{tpu_custom_call.1} parent=23 // pred_region
        %s162 = smul.u32 4, %s16
        %p163 = scmp.lt.s32.totalorder %s162, 7
        %s164 = scalar_select %p163, %s162, 7
        %s165 = smul.addr %s164, 8
        %s166 = scalar_lea.vmem %s0, %s165
        %s167 = smul.u32 4, %s16
      $region28: #{tpu_custom_call.1} parent=23 // pred_fallthru
        _
    $region24: #{tpu_custom_call.1} parent=5 // pred_fallthru
      _
    %p168 = scmp.le.s32.totalorder 1, %s9
    %p169 = scmp.lt.s32.totalorder %s9, 3
    %p170 = pnand %p168, %p169
    %p171 = pneg %p170
    // Predicated region
    $region29: #{tpu_custom_call.1} parent=5 // pred_check
      _
    $region30: #{tpu_custom_call.1} parent=5 // pred_check_branch
      %173 = sbr.rel (%p170) target = $region32
    $region31: #{tpu_custom_call.1} parent=5 // pred_region
      %s174 = ssub.s32 %s9, 1
      %s175 = smul.u32 4, %s18
      %p176 = scmp.lt.s32.totalorder %s175, 7
      %s177 = scalar_select %p176, %s175, 7
      %s178 = smul.addr %s177, 8
      %s179 = scalar_lea.vmem %s0, %s178
      %p180 = pneg %p47
      %p181 = pneg %p44
      %p182 = scmp.lt.s32.totalorder %s19, 0
      %s183 = scalar_select %p182, %s19, 0
      %s184 = smul.addr %s183, 8
      %s185 = scalar_lea.vmem %s1, %s184
      %p186 = pneg %p73
      %p187 = pneg %p70
      %p188 = scmp.lt.s32.totalorder %s19, 0
      %s189 = scalar_select %p188, %s19, 0
      %s190 = scalar_lea.vmem %s2, %s189
      %p191 = pneg %p99
      %p192 = pneg %p96
      %p193 = pneg %p127
      %p194 = pneg %p124
      %s195 = smul.u32 4, %s18
      %p196 = scmp.lt.s32.totalorder %s195, 7
      %s197 = scalar_select %p196, %s195, 7
      %p198 = scmp.lt.s32.totalorder %s19, 0
      %s199 = scalar_select %p198, %s19, 0
      %s200 = sadd.s32 %s199, %s197
      %s201 = smul.addr %s200, 8
      %s202 = scalar_lea.vmem %s3, %s201
      %s203 = smul.u32 4, %s18
      %p204 = scmp.lt.s32.totalorder %s203, 7
      %s205 = scalar_select %p204, %s203, 7
      %s206 = smul.addr %s205, 8
      %s207 = scalar_lea.vmem %s0, %s206
      %s208 = smul.u32 4, %s18
      %p209 = scmp.lt.s32.totalorder %s19, 0
      %s210 = scalar_select %p209, %s19, 0
      %s211 = smul.addr %s210, 8
      %s212 = scalar_lea.vmem %s1, %s211
      %p213 = scmp.lt.s32.totalorder %s19, 0
      %s214 = scalar_select %p213, %s19, 0
      %s215 = scalar_lea.vmem %s2, %s214
      %s216 = smul.u32 4, %s18
      %p217 = scmp.lt.s32.totalorder %s216, 7
      %s218 = scalar_select %p217, %s216, 7
      %p219 = scmp.lt.s32.totalorder %s19, 0
      %s220 = scalar_select %p219, %s19, 0
      %s221 = sadd.s32 %s220, %s218
      %s222 = smul.addr %s221, 8
      %s223 = scalar_lea.vmem %s3, %s222
      %s224 = smul.u32 4, %s18
      %v225 = vld [vmem:[%s207] sm:$0xff]
      %v226 = vld [vmem:[%s207 + $0x8] sm:$0xff]
      %v227 = vld [vmem:[%s207 + $0x10] sm:$0xff]
      %v228 = vld [vmem:[%s207 + $0x18] sm:$0xff]
      %v229 = vld [vmem:[%s212] sm:$0xff]
      %v230 = vld [vmem:[%s212 + $0x8] sm:$0xff]
      %v231 = vld [vmem:[%s212 + $0x10] sm:$0xff]
      %v232 = vld [vmem:[%s212 + $0x18] sm:$0xff]
      %v233 = vld [vmem:[%s215] sm:$0x1]
      %v235 = vperm.slane %v233, 0
      %vm237 = vcmask 261120
      %v239 = vsel %vm237, %v225, 0
      %v242 = vsel %vm237, %v226, 0
      %v245 = vsel %vm237, %v227, 0
      %v248 = vsel %vm237, %v228, 0
      %250 = vmatpush.msra.mxu0 0.0
      %251 = vmatpush.msra.mxu0 0.0
      %252 = vmatpush.msra.mxu0 0.0
      %253 = vmatpush.msra.mxu0 0.0
      %254 = vmatpush.msra.mxu0 0.0
      %255 = vmatpush.msra.mxu0 0.0
      %256 = vmatpush.msra.mxu0 0.0
      %257 = vmatpush.msra.mxu0 0.0
      %258 = vmatpush.msra.mxu0 0.0
      %259 = vmatpush.msra.mxu0 0.0
      %260 = vmatpush.msra.mxu0 0.0
      %261 = vmatpush.msra.mxu0 0.0
      %262 = vmatpush.msra.mxu0 %v232
      %263 = vmatpush.msra.mxu0 %v231
      %264 = vmatpush.msra.mxu0 %v230
      %265 = vmatpush.msra.mxu0 %v229
      %266 = vmatmul.f32.gmra.mxu0 %v239
      %v267 = vpop.f32.mrf.mxu0
      %v268 = vadd.f32 %v235, %v267
      %269 = vmatmul.f32.gmra.mxu0 %v242
      %v270 = vpop.f32.mrf.mxu0
      %v271 = vadd.f32 %v235, %v270
      %272 = vmatmul.f32.gmra.mxu0 %v245
      %v273 = vpop.f32.mrf.mxu0
      %v274 = vadd.f32 %v235, %v273
      %275 = vmatmul.f32.gmra.mxu0 %v248
      %v276 = vpop.f32.mrf.mxu0
      %v277 = vadd.f32 %v235, %v276
      %278 = vdwg.mxu0
      %v279 = vand.u32 2147483647, %v268
      %vm280 = vcmp.le.f32.partialorder %v279, 0.7853982
      %vm281 = vcmp.lt.s32.totalorder %v268, 0
      %v282 = vand.u32 %v268, 2139095040
      %v283 = vshrl.u32 %v282, 23
      %v284 = vsub.s32 %v283, 127
      %v285 = vand.u32 2147483647, %v268
      %v286 = vand.u32 %v285, 8388607
      %v287 = vor.u32 %v286, 8388608
      %v288 = vsub.s32 0, %v287
      %v289 = vadd.s32 %v284, 1
      %vm290 = vcmp.gt.s32.totalorder %v289, 0
      %v291 = vsel %vm290, %v289, 0
      %v292 = vshrl.u32 %v291, 5
      %v293 = vand.u32 %v291, 31
      %v294 = vsub.s32 32, %v293
      %v295 = vshrl.u32 683565275, %v294
      %v296 = vshll.u32 683565275, %v293
      %v297 = vshrl.u32 2475754826, %v294
      %v298 = vor.u32 %v296, %v297
      %v299 = vshll.u32 2475754826, %v293
      %v300 = vshrl.u32 2131351028, %v294
      %v301 = vor.u32 %v299, %v300
      %v302 = vshll.u32 2131351028, %v293
      %v303 = vshrl.u32 2102212464, %v294
      %v304 = vor.u32 %v302, %v303
      %v305 = vshll.u32 2102212464, %v293
      %v306 = vshrl.u32 920167782, %v294
      %v307 = vor.u32 %v305, %v306
      %v308 = vshll.u32 920167782, %v293
      %v309 = vshrl.u32 1326507024, %v294
      %v310 = vor.u32 %v308, %v309
      %vm311 = vcmp.lt.s32.totalorder %v292, 1
      %vm312 = vcmp.lt.s32.totalorder %v292, 2
      %vm313 = vcmp.lt.s32.totalorder %v292, 3
      %vm314 = vcmp.lt.s32.totalorder %v292, 4
      %v315 = vsel %vm311, %v295, %v298
      %v316 = vsel %vm314, %v304, 2102212464
      %v317 = vsel %vm313, %v301, %v316
      %v318 = vsel %vm312, %v315, %v317
      %v319 = vsel %vm311, %v298, %v301
      %v320 = vsel %vm314, %v307, 920167782
      %v321 = vsel %vm313, %v304, %v320
      %v322 = vsel %vm312, %v319, %v321
      %v323 = vsel %vm311, %v301, %v304
      %v324 = vsel %vm314, %v310, 1326507024
      %v325 = vsel %vm313, %v307, %v324
      %v326 = vsel %vm312, %v323, %v325
      %v327 = vshll.u32 %v287, 8
      %v328 = vand.u32 %v327, 65535
      %v329 = vshrl.u32 %v327, 16
      %v330 = vand.u32 %v326, 65535
      %v331 = vshrl.u32 %v326, 16
      %v332 = vmul.u32 %v328, %v330
      %v333 = vmul.u32 %v328, %v331
      %v334 = vmul.u32 %v329, %v330
      %v335 = vmul.u32 %v329, %v331
      %v336 = vshll.u32 %v333, 16
      %v337 = vshrl.u32 %v333, 16
      %v338 = vshll.u32 %v334, 16
      %v339 = vshrl.u32 %v334, 16
      %vm340 = vc.u32 %v332, %v336
      %v341 = vsel %vm340, 1, 0
      %v342 = vadd.s32 %v332, %v336
      %v343 = vadd.s32 %v335, %v341
      %vm344 = vc.u32 %v342, %v338
      %v345 = vsel %vm344, 1, 0
      %v346 = vadd.s32 %v342, %v338
      %v347 = vadd.s32 %v343, %v345
      %v348 = vadd.s32 %v347, %v337
      %v349 = vadd.s32 %v348, %v339
      %v350 = vand.u32 %v327, 65535
      %v351 = vshrl.u32 %v327, 16
      %v352 = vand.u32 %v322, 65535
      %v353 = vshrl.u32 %v322, 16
      %v354 = vmul.u32 %v350, %v352
      %v355 = vmul.u32 %v350, %v353
      %v356 = vmul.u32 %v351, %v352
      %v357 = vmul.u32 %v351, %v353
      %v358 = vshll.u32 %v355, 16
      %v359 = vshrl.u32 %v355, 16
      %v360 = vshll.u32 %v356, 16
      %v361 = vshrl.u32 %v356, 16
      %vm362 = vc.u32 %v354, %v358
      %v363 = vsel %vm362, 1, 0
      %v364 = vadd.s32 %v354, %v358
      %v365 = vadd.s32 %v357, %v363
      %vm366 = vc.u32 %v364, %v360
      %v367 = vsel %vm366, 1, 0
      %v368 = vadd.s32 %v364, %v360
      %v369 = vadd.s32 %v365, %v367
      %v370 = vadd.s32 %v369, %v359
      %v371 = vadd.s32 %v370, %v361
      %v372 = vmul.u32 %v327, %v318
      %v373 = vadd.s32 %v349, %v368
      %vm374 = vc.u32 %v349, %v368
      %v375 = vadd.s32 %v371, 1
      %v376 = vsel %vm374, %v375, %v371
      %v377 = vadd.s32 %v372, %v376
      %v378 = vadd.s32 %v377, 536870912
      %v379 = vshrl.u32 %v378, 30
      %v380 = vshll.u32 %v379, 30
      %v381 = vsub.s32 %v377, %v380
      %vm382 = vcmp.lt.s32.totalorder %v381, 0
      %v383 = vsub.s32 0, %v381
      %v384 = vsel %vm382, %v383, %v381
      %v385 = vclz %v384
      %v386 = vsub.s32 %v385, 2
      %vm387 = vcmp.gt.s32.totalorder 0, %v386
      %v388 = vsel %vm387, 0, %v386
      %v389 = vsub.s32 32, %v388
      %v390 = vshll.u32 %v381, %v388
      %v391 = vshrl.u32 %v373, %v389
      %v392 = vor.u32 %v390, %v391
      %v393 = vsub.s32 4294967266, %v388
      %v394 = vadd.s32 %v393, 127
      %v395 = vshll.u32 %v394, 23
      %v396 = vor.u32 4788187, %v395
      %v397 = vand.u32 2147483647, %v396
      %v399 = vcvt.s32.f32 %v392
      %v400 = vmul.f32 %v399, %v397
      %v401 = vxor.u32 %v400, 2147483648
      %v402 = vsel %vm281, %v401, %v400
      %v403 = vsub.s32 4, %v379
      %v404 = vsel %vm281, %v403, %v379
      %v405 = vsel %vm280, %v268, %v402
      %v406 = vsel %vm280, 0, %v404
      %v407 = vmul.f32 %v405, %v405
      %v408 = vmul.f32 %v407, -0.001358992
      %v409 = vadd.f32 %v408, 0.041655596
      %v410 = vmul.f32 %v407, %v409
      %v411 = vadd.f32 %v410, -0.4999988
      %v412 = vmul.f32 %v407, %v411
      %v413 = vadd.f32 1.0, %v412
      %v414 = vmul.f32 %v405, %v405
      %v415 = vmul.f32 %v414, -0.00019511016
      %v416 = vadd.f32 %v415, 0.008332121
      %v417 = vmul.f32 %v414, %v416
      %v418 = vadd.f32 %v417, -0.16666654
      %v419 = vmul.f32 %v414, %v418
      %v420 = vadd.f32 %v419, 1.0
      %v421 = vmul.f32 %v420, %v405
      %vm422 = vweird.f32 %v268
      %v423 = vadd.s32 %v406, 3
      %v424 = vand.u32 %v423, 3
      %vm425 = vcmp.lt.s32.totalorder %v424, 2
      %vm426 = vcmp.eq.s32.totalorder %v424, 0
      %v427 = vxor.u32 %v421, 2147483648
      %v428 = vsel %vm426, %v413, %v427
      %vm429 = vcmp.eq.s32.totalorder %v424, 2
      %v430 = vxor.u32 %v413, 2147483648
      %v431 = vsel %vm429, %v430, %v421
      %v432 = vsel %vm425, %v428, %v431
      %v433 = vsel %vm422, nan, %v432
      %v434 = vand.u32 2147483647, %v271
      %vm435 = vcmp.le.f32.partialorder %v434, 0.7853982
      %vm436 = vcmp.lt.s32.totalorder %v271, 0
      %v437 = vand.u32 %v271, 2139095040
      %v438 = vshrl.u32 %v437, 23
      %v439 = vsub.s32 %v438, 127
      %v440 = vand.u32 2147483647, %v271
      %v441 = vand.u32 %v440, 8388607
      %v442 = vor.u32 %v441, 8388608
      %v443 = vsub.s32 0, %v442
      %v444 = vadd.s32 %v439, 1
      %vm445 = vcmp.gt.s32.totalorder %v444, 0
      %v446 = vsel %vm445, %v444, 0
      %v447 = vshrl.u32 %v446, 5
      %v448 = vand.u32 %v446, 31
      %v449 = vsub.s32 32, %v448
      %v450 = vshrl.u32 683565275, %v449
      %v451 = vshll.u32 683565275, %v448
      %v452 = vshrl.u32 2475754826, %v449
      %v453 = vor.u32 %v451, %v452
      %v454 = vshll.u32 2475754826, %v448
      %v455 = vshrl.u32 2131351028, %v449
      %v456 = vor.u32 %v454, %v455
      %v457 = vshll.u32 2131351028, %v448
      %v458 = vshrl.u32 2102212464, %v449
      %v459 = vor.u32 %v457, %v458
      %v460 = vshll.u32 2102212464, %v448
      %v461 = vshrl.u32 920167782, %v449
      %v462 = vor.u32 %v460, %v461
      %v463 = vshll.u32 920167782, %v448
      %v464 = vshrl.u32 1326507024, %v449
      %v465 = vor.u32 %v463, %v464
      %vm466 = vcmp.lt.s32.totalorder %v447, 1
      %vm467 = vcmp.lt.s32.totalorder %v447, 2
      %vm468 = vcmp.lt.s32.totalorder %v447, 3
      %vm469 = vcmp.lt.s32.totalorder %v447, 4
      %v470 = vsel %vm466, %v450, %v453
      %v471 = vsel %vm469, %v459, 2102212464
      %v472 = vsel %vm468, %v456, %v471
      %v473 = vsel %vm467, %v470, %v472
      %v474 = vsel %vm466, %v453, %v456
      %v475 = vsel %vm469, %v462, 920167782
      %v476 = vsel %vm468, %v459, %v475
      %v477 = vsel %vm467, %v474, %v476
      %v478 = vsel %vm466, %v456, %v459
      %v479 = vsel %vm469, %v465, 1326507024
      %v480 = vsel %vm468, %v462, %v479
      %v481 = vsel %vm467, %v478, %v480
      %v482 = vshll.u32 %v442, 8
      %v483 = vand.u32 %v482, 65535
      %v484 = vshrl.u32 %v482, 16
      %v485 = vand.u32 %v481, 65535
      %v486 = vshrl.u32 %v481, 16
      %v487 = vmul.u32 %v483, %v485
      %v488 = vmul.u32 %v483, %v486
      %v489 = vmul.u32 %v484, %v485
      %v490 = vmul.u32 %v484, %v486
      %v491 = vshll.u32 %v488, 16
      %v492 = vshrl.u32 %v488, 16
      %v493 = vshll.u32 %v489, 16
      %v494 = vshrl.u32 %v489, 16
      %vm495 = vc.u32 %v487, %v491
      %v496 = vsel %vm495, 1, 0
      %v497 = vadd.s32 %v487, %v491
      %v498 = vadd.s32 %v490, %v496
      %vm499 = vc.u32 %v497, %v493
      %v500 = vsel %vm499, 1, 0
      %v501 = vadd.s32 %v497, %v493
      %v502 = vadd.s32 %v498, %v500
      %v503 = vadd.s32 %v502, %v492
      %v504 = vadd.s32 %v503, %v494
      %v505 = vand.u32 %v482, 65535
      %v506 = vshrl.u32 %v482, 16
      %v507 = vand.u32 %v477, 65535
      %v508 = vshrl.u32 %v477, 16
      %v509 = vmul.u32 %v505, %v507
      %v510 = vmul.u32 %v505, %v508
      %v511 = vmul.u32 %v506, %v507
      %v512 = vmul.u32 %v506, %v508
      %v513 = vshll.u32 %v510, 16
      %v514 = vshrl.u32 %v510, 16
      %v515 = vshll.u32 %v511, 16
      %v516 = vshrl.u32 %v511, 16
      %vm517 = vc.u32 %v509, %v513
      %v518 = vsel %vm517, 1, 0
      %v519 = vadd.s32 %v509, %v513
      %v520 = vadd.s32 %v512, %v518
      %vm521 = vc.u32 %v519, %v515
      %v522 = vsel %vm521, 1, 0
      %v523 = vadd.s32 %v519, %v515
      %v524 = vadd.s32 %v520, %v522
      %v525 = vadd.s32 %v524, %v514
      %v526 = vadd.s32 %v525, %v516
      %v527 = vmul.u32 %v482, %v473
      %v528 = vadd.s32 %v504, %v523
      %vm529 = vc.u32 %v504, %v523
      %v530 = vadd.s32 %v526, 1
      %v531 = vsel %vm529, %v530, %v526
      %v532 = vadd.s32 %v527, %v531
      %v533 = vadd.s32 %v532, 536870912
      %v534 = vshrl.u32 %v533, 30
      %v535 = vshll.u32 %v534, 30
      %v536 = vsub.s32 %v532, %v535
      %vm537 = vcmp.lt.s32.totalorder %v536, 0
      %v538 = vsub.s32 0, %v536
      %v539 = vsel %vm537, %v538, %v536
      %v540 = vclz %v539
      %v541 = vsub.s32 %v540, 2
      %vm542 = vcmp.gt.s32.totalorder 0, %v541
      %v543 = vsel %vm542, 0, %v541
      %v544 = vsub.s32 32, %v543
      %v545 = vshll.u32 %v536, %v543
      %v546 = vshrl.u32 %v528, %v544
      %v547 = vor.u32 %v545, %v546
      %v548 = vsub.s32 4294967266, %v543
      %v549 = vadd.s32 %v548, 127
      %v550 = vshll.u32 %v549, 23
      %v551 = vor.u32 4788187, %v550
      %v552 = vand.u32 2147483647, %v551
      %v554 = vcvt.s32.f32 %v547
      %v555 = vmul.f32 %v554, %v552
      %v556 = vxor.u32 %v555, 2147483648
      %v557 = vsel %vm436, %v556, %v555
      %v558 = vsub.s32 4, %v534
      %v559 = vsel %vm436, %v558, %v534
      %v560 = vsel %vm435, %v271, %v557
      %v561 = vsel %vm435, 0, %v559
      %v562 = vmul.f32 %v560, %v560
      %v563 = vmul.f32 %v562, -0.001358992
      %v564 = vadd.f32 %v563, 0.041655596
      %v565 = vmul.f32 %v562, %v564
      %v566 = vadd.f32 %v565, -0.4999988
      %v567 = vmul.f32 %v562, %v566
      %v568 = vadd.f32 1.0, %v567
      %v569 = vmul.f32 %v560, %v560
      %v570 = vmul.f32 %v569, -0.00019511016
      %v571 = vadd.f32 %v570, 0.008332121
      %v572 = vmul.f32 %v569, %v571
      %v573 = vadd.f32 %v572, -0.16666654
      %v574 = vmul.f32 %v569, %v573
      %v575 = vadd.f32 %v574, 1.0
      %v576 = vmul.f32 %v575, %v560
      %vm577 = vweird.f32 %v271
      %v578 = vadd.s32 %v561, 3
      %v579 = vand.u32 %v578, 3
      %vm580 = vcmp.lt.s32.totalorder %v579, 2
      %vm581 = vcmp.eq.s32.totalorder %v579, 0
      %v582 = vxor.u32 %v576, 2147483648
      %v583 = vsel %vm581, %v568, %v582
      %vm584 = vcmp.eq.s32.totalorder %v579, 2
      %v585 = vxor.u32 %v568, 2147483648
      %v586 = vsel %vm584, %v585, %v576
      %v587 = vsel %vm580, %v583, %v586
      %v588 = vsel %vm577, nan, %v587
      %v589 = vand.u32 2147483647, %v274
      %vm590 = vcmp.le.f32.partialorder %v589, 0.7853982
      %vm591 = vcmp.lt.s32.totalorder %v274, 0
      %v592 = vand.u32 %v274, 2139095040
      %v593 = vshrl.u32 %v592, 23
      %v594 = vsub.s32 %v593, 127
      %v595 = vand.u32 2147483647, %v274
      %v596 = vand.u32 %v595, 8388607
      %v597 = vor.u32 %v596, 8388608
      %v598 = vsub.s32 0, %v597
      %v599 = vadd.s32 %v594, 1
      %vm600 = vcmp.gt.s32.totalorder %v599, 0
      %v601 = vsel %vm600, %v599, 0
      %v602 = vshrl.u32 %v601, 5
      %v603 = vand.u32 %v601, 31
      %v604 = vsub.s32 32, %v603
      %v605 = vshrl.u32 683565275, %v604
      %v606 = vshll.u32 683565275, %v603
      %v607 = vshrl.u32 2475754826, %v604
      %v608 = vor.u32 %v606, %v607
      %v609 = vshll.u32 2475754826, %v603
      %v610 = vshrl.u32 2131351028, %v604
      %v611 = vor.u32 %v609, %v610
      %v612 = vshll.u32 2131351028, %v603
      %v613 = vshrl.u32 2102212464, %v604
      %v614 = vor.u32 %v612, %v613
      %v615 = vshll.u32 2102212464, %v603
      %v616 = vshrl.u32 920167782, %v604
      %v617 = vor.u32 %v615, %v616
      %v618 = vshll.u32 920167782, %v603
      %v619 = vshrl.u32 1326507024, %v604
      %v620 = vor.u32 %v618, %v619
      %vm621 = vcmp.lt.s32.totalorder %v602, 1
      %vm622 = vcmp.lt.s32.totalorder %v602, 2
      %vm623 = vcmp.lt.s32.totalorder %v602, 3
      %vm624 = vcmp.lt.s32.totalorder %v602, 4
      %v625 = vsel %vm621, %v605, %v608
      %v626 = vsel %vm624, %v614, 2102212464
      %v627 = vsel %vm623, %v611, %v626
      %v628 = vsel %vm622, %v625, %v627
      %v629 = vsel %vm621, %v608, %v611
      %v630 = vsel %vm624, %v617, 920167782
      %v631 = vsel %vm623, %v614, %v630
      %v632 = vsel %vm622, %v629, %v631
      %v633 = vsel %vm621, %v611, %v614
      %v634 = vsel %vm624, %v620, 1326507024
      %v635 = vsel %vm623, %v617, %v634
      %v636 = vsel %vm622, %v633, %v635
      %v637 = vshll.u32 %v597, 8
      %v638 = vand.u32 %v637, 65535
      %v639 = vshrl.u32 %v637, 16
      %v640 = vand.u32 %v636, 65535
      %v641 = vshrl.u32 %v636, 16
      %v642 = vmul.u32 %v638, %v640
      %v643 = vmul.u32 %v638, %v641
      %v644 = vmul.u32 %v639, %v640
      %v645 = vmul.u32 %v639, %v641
      %v646 = vshll.u32 %v643, 16
      %v647 = vshrl.u32 %v643, 16
      %v648 = vshll.u32 %v644, 16
      %v649 = vshrl.u32 %v644, 16
      %vm650 = vc.u32 %v642, %v646
      %v651 = vsel %vm650, 1, 0
      %v652 = vadd.s32 %v642, %v646
      %v653 = vadd.s32 %v645, %v651
      %vm654 = vc.u32 %v652, %v648
      %v655 = vsel %vm654, 1, 0
      %v656 = vadd.s32 %v652, %v648
      %v657 = vadd.s32 %v653, %v655
      %v658 = vadd.s32 %v657, %v647
      %v659 = vadd.s32 %v658, %v649
      %v660 = vand.u32 %v637, 65535
      %v661 = vshrl.u32 %v637, 16
      %v662 = vand.u32 %v632, 65535
      %v663 = vshrl.u32 %v632, 16
      %v664 = vmul.u32 %v660, %v662
      %v665 = vmul.u32 %v660, %v663
      %v666 = vmul.u32 %v661, %v662
      %v667 = vmul.u32 %v661, %v663
      %v668 = vshll.u32 %v665, 16
      %v669 = vshrl.u32 %v665, 16
      %v670 = vshll.u32 %v666, 16
      %v671 = vshrl.u32 %v666, 16
      %vm672 = vc.u32 %v664, %v668
      %v673 = vsel %vm672, 1, 0
      %v674 = vadd.s32 %v664, %v668
      %v675 = vadd.s32 %v667, %v673
      %vm676 = vc.u32 %v674, %v670
      %v677 = vsel %vm676, 1, 0
      %v678 = vadd.s32 %v674, %v670
      %v679 = vadd.s32 %v675, %v677
      %v680 = vadd.s32 %v679, %v669
      %v681 = vadd.s32 %v680, %v671
      %v682 = vmul.u32 %v637, %v628
      %v683 = vadd.s32 %v659, %v678
      %vm684 = vc.u32 %v659, %v678
      %v685 = vadd.s32 %v681, 1
      %v686 = vsel %vm684, %v685, %v681
      %v687 = vadd.s32 %v682, %v686
      %v688 = vadd.s32 %v687, 536870912
      %v689 = vshrl.u32 %v688, 30
      %v690 = vshll.u32 %v689, 30
      %v691 = vsub.s32 %v687, %v690
      %vm692 = vcmp.lt.s32.totalorder %v691, 0
      %v693 = vsub.s32 0, %v691
      %v694 = vsel %vm692, %v693, %v691
      %v695 = vclz %v694
      %v696 = vsub.s32 %v695, 2
      %vm697 = vcmp.gt.s32.totalorder 0, %v696
      %v698 = vsel %vm697, 0, %v696
      %v699 = vsub.s32 32, %v698
      %v700 = vshll.u32 %v691, %v698
      %v701 = vshrl.u32 %v683, %v699
      %v702 = vor.u32 %v700, %v701
      %v703 = vsub.s32 4294967266, %v698
      %v704 = vadd.s32 %v703, 127
      %v705 = vshll.u32 %v704, 23
      %v706 = vor.u32 4788187, %v705
      %v707 = vand.u32 2147483647, %v706
      %v709 = vcvt.s32.f32 %v702
      %v710 = vmul.f32 %v709, %v707
      %v711 = vxor.u32 %v710, 2147483648
      %v712 = vsel %vm591, %v711, %v710
      %v713 = vsub.s32 4, %v689
      %v714 = vsel %vm591, %v713, %v689
      %v715 = vsel %vm590, %v274, %v712
      %v716 = vsel %vm590, 0, %v714
      %v717 = vmul.f32 %v715, %v715
      %v718 = vmul.f32 %v717, -0.001358992
      %v719 = vadd.f32 %v718, 0.041655596
      %v720 = vmul.f32 %v717, %v719
      %v721 = vadd.f32 %v720, -0.4999988
      %v722 = vmul.f32 %v717, %v721
      %v723 = vadd.f32 1.0, %v722
      %v724 = vmul.f32 %v715, %v715
      %v725 = vmul.f32 %v724, -0.00019511016
      %v726 = vadd.f32 %v725, 0.008332121
      %v727 = vmul.f32 %v724, %v726
      %v728 = vadd.f32 %v727, -0.16666654
      %v729 = vmul.f32 %v724, %v728
      %v730 = vadd.f32 %v729, 1.0
      %v731 = vmul.f32 %v730, %v715
      %vm732 = vweird.f32 %v274
      %v733 = vadd.s32 %v716, 3
      %v734 = vand.u32 %v733, 3
      %vm735 = vcmp.lt.s32.totalorder %v734, 2
      %vm736 = vcmp.eq.s32.totalorder %v734, 0
      %v737 = vxor.u32 %v731, 2147483648
      %v738 = vsel %vm736, %v723, %v737
      %vm739 = vcmp.eq.s32.totalorder %v734, 2
      %v740 = vxor.u32 %v723, 2147483648
      %v741 = vsel %vm739, %v740, %v731
      %v742 = vsel %vm735, %v738, %v741
      %v743 = vsel %vm732, nan, %v742
      %v744 = vand.u32 2147483647, %v277
      %vm745 = vcmp.le.f32.partialorder %v744, 0.7853982
      %vm746 = vcmp.lt.s32.totalorder %v277, 0
      %v747 = vand.u32 %v277, 2139095040
      %v748 = vshrl.u32 %v747, 23
      %v749 = vsub.s32 %v748, 127
      %v750 = vand.u32 2147483647, %v277
      %v751 = vand.u32 %v750, 8388607
      %v752 = vor.u32 %v751, 8388608
      %v753 = vsub.s32 0, %v752
      %v754 = vadd.s32 %v749, 1
      %vm755 = vcmp.gt.s32.totalorder %v754, 0
      %v756 = vsel %vm755, %v754, 0
      %v757 = vshrl.u32 %v756, 5
      %v758 = vand.u32 %v756, 31
      %v759 = vsub.s32 32, %v758
      %v760 = vshrl.u32 683565275, %v759
      %v761 = vshll.u32 683565275, %v758
      %v762 = vshrl.u32 2475754826, %v759
      %v763 = vor.u32 %v761, %v762
      %v764 = vshll.u32 2475754826, %v758
      %v765 = vshrl.u32 2131351028, %v759
      %v766 = vor.u32 %v764, %v765
      %v767 = vshll.u32 2131351028, %v758
      %v768 = vshrl.u32 2102212464, %v759
      %v769 = vor.u32 %v767, %v768
      %v770 = vshll.u32 2102212464, %v758
      %v771 = vshrl.u32 920167782, %v759
      %v772 = vor.u32 %v770, %v771
      %v773 = vshll.u32 920167782, %v758
      %v774 = vshrl.u32 1326507024, %v759
      %v775 = vor.u32 %v773, %v774
      %vm776 = vcmp.lt.s32.totalorder %v757, 1
      %vm777 = vcmp.lt.s32.totalorder %v757, 2
      %vm778 = vcmp.lt.s32.totalorder %v757, 3
      %vm779 = vcmp.lt.s32.totalorder %v757, 4
      %v780 = vsel %vm776, %v760, %v763
      %v781 = vsel %vm779, %v769, 2102212464
      %v782 = vsel %vm778, %v766, %v781
      %v783 = vsel %vm777, %v780, %v782
      %v784 = vsel %vm776, %v763, %v766
      %v785 = vsel %vm779, %v772, 920167782
      %v786 = vsel %vm778, %v769, %v785
      %v787 = vsel %vm777, %v784, %v786
      %v788 = vsel %vm776, %v766, %v769
      %v789 = vsel %vm779, %v775, 1326507024
      %v790 = vsel %vm778, %v772, %v789
      %v791 = vsel %vm777, %v788, %v790
      %v792 = vshll.u32 %v752, 8
      %v793 = vand.u32 %v792, 65535
      %v794 = vshrl.u32 %v792, 16
      %v795 = vand.u32 %v791, 65535
      %v796 = vshrl.u32 %v791, 16
      %v797 = vmul.u32 %v793, %v795
      %v798 = vmul.u32 %v793, %v796
      %v799 = vmul.u32 %v794, %v795
      %v800 = vmul.u32 %v794, %v796
      %v801 = vshll.u32 %v798, 16
      %v802 = vshrl.u32 %v798, 16
      %v803 = vshll.u32 %v799, 16
      %v804 = vshrl.u32 %v799, 16
      %vm805 = vc.u32 %v797, %v801
      %v806 = vsel %vm805, 1, 0
      %v807 = vadd.s32 %v797, %v801
      %v808 = vadd.s32 %v800, %v806
      %vm809 = vc.u32 %v807, %v803
      %v810 = vsel %vm809, 1, 0
      %v811 = vadd.s32 %v807, %v803
      %v812 = vadd.s32 %v808, %v810
      %v813 = vadd.s32 %v812, %v802
      %v814 = vadd.s32 %v813, %v804
      %v815 = vand.u32 %v792, 65535
      %v816 = vshrl.u32 %v792, 16
      %v817 = vand.u32 %v787, 65535
      %v818 = vshrl.u32 %v787, 16
      %v819 = vmul.u32 %v815, %v817
      %v820 = vmul.u32 %v815, %v818
      %v821 = vmul.u32 %v816, %v817
      %v822 = vmul.u32 %v816, %v818
      %v823 = vshll.u32 %v820, 16
      %v824 = vshrl.u32 %v820, 16
      %v825 = vshll.u32 %v821, 16
      %v826 = vshrl.u32 %v821, 16
      %vm827 = vc.u32 %v819, %v823
      %v828 = vsel %vm827, 1, 0
      %v829 = vadd.s32 %v819, %v823
      %v830 = vadd.s32 %v822, %v828
      %vm831 = vc.u32 %v829, %v825
      %v832 = vsel %vm831, 1, 0
      %v833 = vadd.s32 %v829, %v825
      %v834 = vadd.s32 %v830, %v832
      %v835 = vadd.s32 %v834, %v824
      %v836 = vadd.s32 %v835, %v826
      %v837 = vmul.u32 %v792, %v783
      %v838 = vadd.s32 %v814, %v833
      %vm839 = vc.u32 %v814, %v833
      %v840 = vadd.s32 %v836, 1
      %v841 = vsel %vm839, %v840, %v836
      %v842 = vadd.s32 %v837, %v841
      %v843 = vadd.s32 %v842, 536870912
      %v844 = vshrl.u32 %v843, 30
      %v845 = vshll.u32 %v844, 30
      %v846 = vsub.s32 %v842, %v845
      %vm847 = vcmp.lt.s32.totalorder %v846, 0
      %v848 = vsub.s32 0, %v846
      %v849 = vsel %vm847, %v848, %v846
      %v850 = vclz %v849
      %v851 = vsub.s32 %v850, 2
      %vm852 = vcmp.gt.s32.totalorder 0, %v851
      %v853 = vsel %vm852, 0, %v851
      %v854 = vsub.s32 32, %v853
      %v855 = vshll.u32 %v846, %v853
      %v856 = vshrl.u32 %v838, %v854
      %v857 = vor.u32 %v855, %v856
      %v858 = vsub.s32 4294967266, %v853
      %v859 = vadd.s32 %v858, 127
      %v860 = vshll.u32 %v859, 23
      %v861 = vor.u32 4788187, %v860
      %v862 = vand.u32 2147483647, %v861
      %v864 = vcvt.s32.f32 %v857
      %v865 = vmul.f32 %v864, %v862
      %v866 = vxor.u32 %v865, 2147483648
      %v867 = vsel %vm746, %v866, %v865
      %v868 = vsub.s32 4, %v844
      %v869 = vsel %vm746, %v868, %v844
      %v870 = vsel %vm745, %v277, %v867
      %v871 = vsel %vm745, 0, %v869
      %v872 = vmul.f32 %v870, %v870
      %v873 = vmul.f32 %v872, -0.001358992
      %v874 = vadd.f32 %v873, 0.041655596
      %v875 = vmul.f32 %v872, %v874
      %v876 = vadd.f32 %v875, -0.4999988
      %v877 = vmul.f32 %v872, %v876
      %v878 = vadd.f32 1.0, %v877
      %v879 = vmul.f32 %v870, %v870
      %v880 = vmul.f32 %v879, -0.00019511016
      %v881 = vadd.f32 %v880, 0.008332121
      %v882 = vmul.f32 %v879, %v881
      %v883 = vadd.f32 %v882, -0.16666654
      %v884 = vmul.f32 %v879, %v883
      %v885 = vadd.f32 %v884, 1.0
      %v886 = vmul.f32 %v885, %v870
      %vm887 = vweird.f32 %v277
      %v888 = vadd.s32 %v871, 3
      %v889 = vand.u32 %v888, 3
      %vm890 = vcmp.lt.s32.totalorder %v889, 2
      %vm891 = vcmp.eq.s32.totalorder %v889, 0
      %v892 = vxor.u32 %v886, 2147483648
      %v893 = vsel %vm891, %v878, %v892
      %vm894 = vcmp.eq.s32.totalorder %v889, 2
      %v895 = vxor.u32 %v878, 2147483648
      %v896 = vsel %vm894, %v895, %v886
      %v897 = vsel %vm890, %v893, %v896
      %v898 = vsel %vm887, nan, %v897
      %899 = vst.msk [vmem:[%s223] sm:$0xff] %vm237, %v433
      %900 = vst.msk [vmem:[%s223 + $0x8] sm:$0xff] %vm237, %v588
      %901 = vst.msk [vmem:[%s223 + $0x10] sm:$0xff] %vm237, %v743
      %902 = vst.msk [vmem:[%s223 + $0x18] sm:$0xff] %vm237, %v898
      %s903 = smul.u32 4, %s18
      %p904 = scmp.lt.s32.totalorder %s903, 7
      %s905 = scalar_select %p904, %s903, 7
      %p906 = scmp.lt.s32.totalorder %s19, 0
      %s907 = scalar_select %p906, %s19, 0
      %s908 = sadd.s32 %s907, %s905
      %s909 = smul.addr %s908, 8
      %s910 = scalar_lea.vmem %s3, %s909
      // Predicated region
      $region33: #{tpu_custom_call.1} parent=31 // pred_check
        %p911 = pneg %p124
      $region34: #{tpu_custom_call.1} parent=31 // pred_check_branch
        %913 = sbr.rel (%p911) target = $region36
      $region35: #{tpu_custom_call.1} parent=31 // pred_region
        %s914 = smul.u32 4, %s18
      $region36: #{tpu_custom_call.1} parent=31 // pred_fallthru
        _
    $region32: #{tpu_custom_call.1} parent=5 // pred_fallthru
      _
    %p915 = scmp.le.s32.totalorder 2, %s9
    // Predicated region
    $region37: #{tpu_custom_call.1} parent=5 // pred_check
      %p916 = pneg %p915
    $region38: #{tpu_custom_call.1} parent=5 // pred_check_branch
      %918 = sbr.rel (%p916) target = $region40
    $region39: #{tpu_custom_call.1} parent=5 // pred_region
      %s919 = ssub.s32 %s9, 2
      // Predicated region
      $region41: #{tpu_custom_call.1} parent=39 // pred_check
        %p920 = pneg %p130
      $region42: #{tpu_custom_call.1} parent=39 // pred_check_branch
        %922 = sbr.rel (%p920) target = $region44
      $region43: #{tpu_custom_call.1} parent=39 // pred_region
        %s923 = smul.u32 4, %s20
        %p924 = scmp.lt.s32.totalorder %s923, 7
        %s925 = scalar_select %p924, %s923, 7
        %p926 = scmp.lt.s32.totalorder %s21, 0
        %s927 = scalar_select %p926, %s21, 0
        %s928 = sadd.s32 %s927, %s925
        %s929 = smul.addr %s928, 8
        %s930 = scalar_lea.vmem %s3, %s929
      $region44: #{tpu_custom_call.1} parent=39 // pred_fallthru
        _
    $region40: #{tpu_custom_call.1} parent=5 // pred_fallthru
      _
  $region6: #{tpu_custom_call.1} parent=0 // loop_footer
    %s13 = sadd.s32 1, %s9
  $region7: #{tpu_custom_call.1} parent=0 // loop_footer_branch
    %8 = sbr.rel target = $region3
  $region8: #{tpu_custom_call.1} parent=0 // loop_exit
    _

// kernel: tpu_custom_call.1
$region0: #{tpu_custom_call.1}
  #allocation0 [shape = 'u32[]', space=smem, size = 0x4, offset = 0x4, fixed_abs, tag = 'smem constant byte address 0x4 - core index']
  #allocation1 [shape = 'u32[72,128]{1,0:T(1,128)}', space=vmem, size = 0x9000, scoped, tag = 'internal scratch']
  %s0 = inlined_call_operand.vmem [shape: f32[64,32], index: 0, kind: input, shape index: {}]
  %s1 = inlined_call_operand.vmem [shape: f32[32,32], index: 1, kind: input, shape index: {}]
  %s2 = inlined_call_operand.vmem [shape: f32[1,32], index: 2, kind: input, shape index: {}]
  %s3 = inlined_call_operand.vmem [shape: f32[64,32], index: 3, kind: output, shape index: {}]
  %s4 = sld [smem:[#allocation0]]
  $region45: #{tpu_custom_call.1} parent=0
    _
  %s6 = ssub.s32 1, %s4
  %s7 = scalar_select 0, %s6, %s4
  loop: start=0, step=1, limit=4
  $region2: #{tpu_custom_call.1} parent=0 // loop_pre_header
    _
  $region3: #{tpu_custom_call.1} parent=0 // loop_header
    %s9 = sphi 0, %s13
    %p10 = scmp.ge.s32.totalorder %s9, 4
    %s16 = sphi 0, %s28
    %s17 = sphi 0, %s24
    %s18 = sphi 0, %s16
    %s19 = sphi 0, %s17
    %s20 = sphi 0, %s18
    %s21 = sphi 0, %s19
    %s31 = sphi 0, %s33
    %s34 = sphi 0, %s31
    %s35 = sphi 0, %s34
    %s51 = sphi 0, %s35
    %s57 = sphi 0, %s59
    %s60 = sphi 0, %s57
    %s61 = sphi 0, %s60
    %s77 = sphi 0, %s61
    %s83 = sphi 0, %s85
    %s86 = sphi 0, %s83
    %s87 = sphi 0, %s86
    %s103 = sphi 0, %s87
    %s111 = sphi 0, %s113
    %s114 = sphi 0, %s111
    %s115 = sphi 0, %s114
    %s131 = sphi 0, %s115
  $region4: #{tpu_custom_call.1} parent=0 // loop_header_branch
    %12 = sbr.rel (%p10) target = $region8
  $region5: #{tpu_custom_call.1} parent=0 // loop_body
    %s14 = ssub.s32 %s9, 1
    %s15 = ssub.s32 %s9, 2
    %s22 = sadd.s32 1, %s17
    %p23 = scmp.ge.s32.totalorder %s22, 1
    %s24 = scalar_select %p23, 0, %s22
    %s25 = sadd.s32 1, %s16
    %s26 = scalar_select %p23, %s25, %s16
    %p27 = scmp.ge.s32.totalorder %s26, 2
    %s28 = scalar_select %p27, 0, %s26
    %s29 = ssub.s32 %s16, %s28
    %p30 = scmp.eq.s32.totalorder %s29, 0
    %s32 = sadd.s32 %s31, 1
    %s33 = scalar_select %p30, %s31, %s32
    %p36 = pneg %p30
    %p37 = scmp.eq.s32.totalorder %s9, 1
    %p38 = por %p36, %p37
    %p39 = scmp.ne.s32.totalorder %s31, %s34
    %p40 = scmp.eq.s32.totalorder %s9, 0
    %p41 = por %p39, %p40
    %p42 = scmp.ne.s32.totalorder %s31, %s34
    %p43 = scmp.eq.s32.totalorder %s14, 1
    %p44 = por %p42, %p43
    %p45 = scmp.ne.s32.totalorder %s34, %s35
    %p46 = scmp.eq.s32.totalorder %s14, 0
    %p47 = por %p45, %p46
    %p48 = scmp.ne.s32.totalorder %s34, %s35
    %p49 = scmp.eq.s32.totalorder %s15, 1
    %p50 = por %p48, %p49
    %p52 = scmp.ne.s32.totalorder %s35, %s51
    %p53 = scmp.eq.s32.totalorder %s15, 0
    %p54 = por %p52, %p53
    %s55 = ssub.s32 %s17, %s24
    %p56 = scmp.eq.s32.totalorder %s55, 0
    %s58 = sadd.s32 %s57, 1
    %s59 = scalar_select %p56, %s57, %s58
    %p62 = pneg %p56
    %p63 = scmp.eq.s32.totalorder %s9, 1
    %p64 = por %p62, %p63
    %p65 = scmp.ne.s32.totalorder %s57, %s60
    %p66 = scmp.eq.s32.totalorder %s9, 0
    %p67 = por %p65, %p66
    %p68 = scmp.ne.s32.totalorder %s57, %s60
    %p69 = scmp.eq.s32.totalorder %s14, 1
    %p70 = por %p68, %p69
    %p71 = scmp.ne.s32.totalorder %s60, %s61
    %p72 = scmp.eq.s32.totalorder %s14, 0
    %p73 = por %p71, %p72
    %p74 = scmp.ne.s32.totalorder %s60, %s61
    %p75 = scmp.eq.s32.totalorder %s15, 1
    %p76 = por %p74, %p75
    %p78 = scmp.ne.s32.totalorder %s61, %s77
    %p79 = scmp.eq.s32.totalorder %s15, 0
    %p80 = por %p78, %p79
    %s81 = ssub.s32 %s17, %s24
    %p82 = scmp.eq.s32.totalorder %s81, 0
    %s84 = sadd.s32 %s83, 1
    %s85 = scalar_select %p82, %s83, %s84
    %p88 = pneg %p82
    %p89 = scmp.eq.s32.totalorder %s9, 1
    %p90 = por %p88, %p89
    %p91 = scmp.ne.s32.totalorder %s83, %s86
    %p92 = scmp.eq.s32.totalorder %s9, 0
    %p93 = por %p91, %p92
    %p94 = scmp.ne.s32.totalorder %s83, %s86
    %p95 = scmp.eq.s32.totalorder %s14, 1
    %p96 = por %p94, %p95
    %p97 = scmp.ne.s32.totalorder %s86, %s87
    %p98 = scmp.eq.s32.totalorder %s14, 0
    %p99 = por %p97, %p98
    %p100 = scmp.ne.s32.totalorder %s86, %s87
    %p101 = scmp.eq.s32.totalorder %s15, 1
    %p102 = por %p100, %p101
    %p104 = scmp.ne.s32.totalorder %s87, %s103
    %p105 = scmp.eq.s32.totalorder %s15, 0
    %p106 = por %p104, %p105
    %s107 = ssub.s32 %s16, %s28
    %s108 = ssub.s32 %s17, %s24
    %s109 = sor.u32 %s107, %s108
    %p110 = scmp.eq.s32.totalorder %s109, 0
    %s112 = sadd.s32 %s111, 1
    %s113 = scalar_select %p110, %s111, %s112
    %p116 = pneg %p110
    %p117 = scmp.eq.s32.totalorder %s9, 1
    %p118 = por %p116, %p117
    %p119 = scmp.ne.s32.totalorder %s111, %s114
    %p120 = scmp.eq.s32.totalorder %s9, 0
    %p121 = por %p119, %p120
    %p122 = scmp.ne.s32.totalorder %s111, %s114
    %p123 = scmp.eq.s32.totalorder %s14, 1
    %p124 = por %p122, %p123
    %p125 = scmp.ne.s32.totalorder %s114, %s115
    %p126 = scmp.eq.s32.totalorder %s14, 0
    %p127 = por %p125, %p126
    %p128 = scmp.ne.s32.totalorder %s114, %s115
    %p129 = scmp.eq.s32.totalorder %s15, 1
    %p130 = por %p128, %p129
    %p132 = scmp.ne.s32.totalorder %s115, %s131
    %p133 = scmp.eq.s32.totalorder %s15, 0
    %p134 = por %p132, %p133
    %p135 = scmp.le.s32.totalorder 1, %s9
    %p136 = scmp.lt.s32.totalorder %s9, 3
    %p137 = pnand %p135, %p136
    %p138 = pneg %p137
    // Predicated region
    $region9: #{tpu_custom_call.1} parent=5 // pred_check
      _
    $region10: #{tpu_custom_call.1} parent=5 // pred_check_branch
      %140 = sbr.rel (%p137) target = $region12
    $region11: #{tpu_custom_call.1} parent=5 // pred_region
      %s141 = ssub.s32 %s9, 1
      // Predicated region
      $region13: #{tpu_custom_call.1} parent=11 // pred_check
        %p142 = pneg %p73
      $region14: #{tpu_custom_call.1} parent=11 // pred_check_branch
        %144 = sbr.rel (%p142) target = $region16
      $region15: #{tpu_custom_call.1} parent=11 // pred_region
        %p145 = scmp.lt.s32.totalorder %s19, 0
        %s146 = scalar_select %p145, %s19, 0
        %s147 = smul.addr %s146, 8
        %s148 = scalar_lea.vmem %s1, %s147
      $region16: #{tpu_custom_call.1} parent=11 // pred_fallthru
        _
      // Predicated region
      $region17: #{tpu_custom_call.1} parent=11 // pred_check
        %p149 = pneg %p99
      $region18: #{tpu_custom_call.1} parent=11 // pred_check_branch
        %151 = sbr.rel (%p149) target = $region20
      $region19: #{tpu_custom_call.1} parent=11 // pred_region
        %p152 = scmp.lt.s32.totalorder %s19, 0
        %s153 = scalar_select %p152, %s19, 0
        %s154 = scalar_lea.vmem %s2, %s153
      $region20: #{tpu_custom_call.1} parent=11 // pred_fallthru
        _
    $region12: #{tpu_custom_call.1} parent=5 // pred_fallthru
      _
    %p155 = scmp.lt.s32.totalorder %s9, 2
    // Predicated region
    $region21: #{tpu_custom_call.1} parent=5 // pred_check
      %p156 = pneg %p155
    $region22: #{tpu_custom_call.1} parent=5 // pred_check_branch
      %158 = sbr.rel (%p156) target = $region24
    $region23: #{tpu_custom_call.1} parent=5 // pred_region
      // Predicated region
      $region25: #{tpu_custom_call.1} parent=23 // pred_check
        %p159 = pneg %p41
      $region26: #{tpu_custom_call.1} parent=23 // pred_check_branch
        %161 = sbr.rel (%p159) target = $region28
      $region27: #{tpu_custom_call.1} parent=23 // pred_region
        %s162 = smul.u32 4, %s16
        %p163 = scmp.lt.s32.totalorder %s162, 7
        %s164 = scalar_select %p163, %s162, 7
        %s165 = smul.addr %s164, 8
        %s166 = scalar_lea.vmem %s0, %s165
        %s167 = smul.u32 4, %s16
      $region28: #{tpu_custom_call.1} parent=23 // pred_fallthru
        _
    $region24: #{tpu_custom_call.1} parent=5 // pred_fallthru
      _
    %p168 = scmp.le.s32.totalorder 1, %s9
    %p169 = scmp.lt.s32.totalorder %s9, 3
    %p170 = pnand %p168, %p169
    %p171 = pneg %p170
    // Predicated region
    $region29: #{tpu_custom_call.1} parent=5 // pred_check
      _
    $region30: #{tpu_custom_call.1} parent=5 // pred_check_branch
      %173 = sbr.rel (%p170) target = $region32
    $region31: #{tpu_custom_call.1} parent=5 // pred_region
      %s174 = ssub.s32 %s9, 1
      %s175 = smul.u32 4, %s18
      %p176 = scmp.lt.s32.totalorder %s175, 7
      %s177 = scalar_select %p176, %s175, 7
      %s178 = smul.addr %s177, 8
      %s179 = scalar_lea.vmem %s0, %s178
      %p180 = pneg %p47
      %p181 = pneg %p44
      %p182 = scmp.lt.s32.totalorder %s19, 0
      %s183 = scalar_select %p182, %s19, 0
      %s184 = smul.addr %s183, 8
      %s185 = scalar_lea.vmem %s1, %s184
      %p186 = pneg %p73
      %p187 = pneg %p70
      %p188 = scmp.lt.s32.totalorder %s19, 0
      %s189 = scalar_select %p188, %s19, 0
      %s190 = scalar_lea.vmem %s2, %s189
      %p191 = pneg %p99
      %p192 = pneg %p96
      %p193 = pneg %p127
      %p194 = pneg %p124
      %s195 = smul.u32 4, %s18
      %p196 = scmp.lt.s32.totalorder %s195, 7
      %s197 = scalar_select %p196, %s195, 7
      %p198 = scmp.lt.s32.totalorder %s19, 0
      %s199 = scalar_select %p198, %s19, 0
      %s200 = sadd.s32 %s199, %s197
      %s201 = smul.addr %s200, 8
      %s202 = scalar_lea.vmem %s3, %s201
      %s203 = smul.u32 4, %s18
      %p204 = scmp.lt.s32.totalorder %s203, 7
      %s205 = scalar_select %p204, %s203, 7
      %s206 = smul.addr %s205, 8
      %s207 = scalar_lea.vmem %s0, %s206
      %s208 = smul.u32 4, %s18
      %p209 = scmp.lt.s32.totalorder %s19, 0
      %s210 = scalar_select %p209, %s19, 0
      %s211 = smul.addr %s210, 8
      %s212 = scalar_lea.vmem %s1, %s211
      %p213 = scmp.lt.s32.totalorder %s19, 0
      %s214 = scalar_select %p213, %s19, 0
      %s215 = scalar_lea.vmem %s2, %s214
      %s216 = smul.u32 4, %s18
      %p217 = scmp.lt.s32.totalorder %s216, 7
      %s218 = scalar_select %p217, %s216, 7
      %p219 = scmp.lt.s32.totalorder %s19, 0
      %s220 = scalar_select %p219, %s19, 0
      %s221 = sadd.s32 %s220, %s218
      %s222 = smul.addr %s221, 8
      %s223 = scalar_lea.vmem %s3, %s222
      %s224 = smul.u32 4, %s18
      %v225 = vld [vmem:[%s207] sm:$0xff]
      %v226 = vld [vmem:[%s207 + $0x8] sm:$0xff]
      %v227 = vld [vmem:[%s207 + $0x10] sm:$0xff]
      %v228 = vld [vmem:[%s207 + $0x18] sm:$0xff]
      %v229 = vld [vmem:[%s212] sm:$0xff]
      %v230 = vld [vmem:[%s212 + $0x8] sm:$0xff]
      %v231 = vld [vmem:[%s212 + $0x10] sm:$0xff]
      %v232 = vld [vmem:[%s212 + $0x18] sm:$0xff]
      %v233 = vld [vmem:[%s215] sm:$0x1]
      %v235 = vperm.slane %v233, 0
      %vm237 = vcmask 261120
      %v239 = vsel %vm237, %v225, 0
      %v242 = vsel %vm237, %v226, 0
      %v245 = vsel %vm237, %v227, 0
      %v248 = vsel %vm237, %v228, 0
      %250 = vmatpush.msra.mxu0 0.0
      %251 = vmatpush.msra.mxu0 0.0
      %252 = vmatpush.msra.mxu0 0.0
      %253 = vmatpush.msra.mxu0 0.0
      %254 = vmatpush.msra.mxu0 0.0
      %255 = vmatpush.msra.mxu0 0.0
      %256 = vmatpush.msra.mxu0 0.0
      %257 = vmatpush.msra.mxu0 0.0
      %258 = vmatpush.msra.mxu0 0.0
      %259 = vmatpush.msra.mxu0 0.0
      %260 = vmatpush.msra.mxu0 0.0
      %261 = vmatpush.msra.mxu0 0.0
      %262 = vmatpush.msra.mxu0 %v232
      %263 = vmatpush.msra.mxu0 %v231
      %264 = vmatpush.msra.mxu0 %v230
      %265 = vmatpush.msra.mxu0 %v229
      %266 = vmatmul.f32.gmra.mxu0 %v239
      %v267 = vpop.f32.mrf.mxu0
      %v268 = vadd.f32 %v235, %v267
      %269 = vmatmul.f32.gmra.mxu0 %v242
      %v270 = vpop.f32.mrf.mxu0
      %v271 = vadd.f32 %v235, %v270
      %272 = vmatmul.f32.gmra.mxu0 %v245
      %v273 = vpop.f32.mrf.mxu0
      %v274 = vadd.f32 %v235, %v273
      %275 = vmatmul.f32.gmra.mxu0 %v248
      %v276 = vpop.f32.mrf.mxu0
      %v277 = vadd.f32 %v235, %v276
      %278 = vdwg.mxu0
      %v279 = vand.u32 2147483647, %v268
      %vm280 = vcmp.le.f32.partialorder %v279, 0.7853982
      %vm281 = vcmp.lt.s32.totalorder %v268, 0
      %v282 = vand.u32 %v268, 2139095040
      %v283 = vshrl.u32 %v282, 23
      %v284 = vsub.s32 %v283, 127
      %v285 = vand.u32 2147483647, %v268
      %v286 = vand.u32 %v285, 8388607
      %v287 = vor.u32 %v286, 8388608
      %v288 = vsub.s32 0, %v287
      %v289 = vadd.s32 %v284, 1
      %vm290 = vcmp.gt.s32.totalorder %v289, 0
      %v291 = vsel %vm290, %v289, 0
      %v292 = vshrl.u32 %v291, 5
      %v293 = vand.u32 %v291, 31
      %v294 = vsub.s32 32, %v293
      %v295 = vshrl.u32 683565275, %v294
      %v296 = vshll.u32 683565275, %v293
      %v297 = vshrl.u32 2475754826, %v294
      %v298 = vor.u32 %v296, %v297
      %v299 = vshll.u32 2475754826, %v293
      %v300 = vshrl.u32 2131351028, %v294
      %v301 = vor.u32 %v299, %v300
      %v302 = vshll.u32 2131351028, %v293
      %v303 = vshrl.u32 2102212464, %v294
      %v304 = vor.u32 %v302, %v303
      %v305 = vshll.u32 2102212464, %v293
      %v306 = vshrl.u32 920167782, %v294
      %v307 = vor.u32 %v305, %v306
      %v308 = vshll.u32 920167782, %v293
      %v309 = vshrl.u32 1326507024, %v294
      %v310 = vor.u32 %v308, %v309
      %vm311 = vcmp.lt.s32.totalorder %v292, 1
      %vm312 = vcmp.lt.s32.totalorder %v292, 2
      %vm313 = vcmp.lt.s32.totalorder %v292, 3
      %vm314 = vcmp.lt.s32.totalorder %v292, 4
      %v315 = vsel %vm311, %v295, %v298
      %v316 = vsel %vm314, %v304, 2102212464
      %v317 = vsel %vm313, %v301, %v316
      %v318 = vsel %vm312, %v315, %v317
      %v319 = vsel %vm311, %v298, %v301
      %v320 = vsel %vm314, %v307, 920167782
      %v321 = vsel %vm313, %v304, %v320
      %v322 = vsel %vm312, %v319, %v321
      %v323 = vsel %vm311, %v301, %v304
      %v324 = vsel %vm314, %v310, 1326507024
      %v325 = vsel %vm313, %v307, %v324
      %v326 = vsel %vm312, %v323, %v325
      %v327 = vshll.u32 %v287, 8
      %v328 = vand.u32 %v327, 65535
      %v329 = vshrl.u32 %v327, 16
      %v330 = vand.u32 %v326, 65535
      %v331 = vshrl.u32 %v326, 16
      %v332 = vmul.u32 %v328, %v330
      %v333 = vmul.u32 %v328, %v331
      %v334 = vmul.u32 %v329, %v330
      %v335 = vmul.u32 %v329, %v331
      %v336 = vshll.u32 %v333, 16
      %v337 = vshrl.u32 %v333, 16
      %v338 = vshll.u32 %v334, 16
      %v339 = vshrl.u32 %v334, 16
      %vm340 = vc.u32 %v332, %v336
      %v341 = vsel %vm340, 1, 0
      %v342 = vadd.s32 %v332, %v336
      %v343 = vadd.s32 %v335, %v341
      %vm344 = vc.u32 %v342, %v338
      %v345 = vsel %vm344, 1, 0
      %v346 = vadd.s32 %v342, %v338
      %v347 = vadd.s32 %v343, %v345
      %v348 = vadd.s32 %v347, %v337
      %v349 = vadd.s32 %v348, %v339
      %v350 = vand.u32 %v327, 65535
      %v351 = vshrl.u32 %v327, 16
      %v352 = vand.u32 %v322, 65535
      %v353 = vshrl.u32 %v322, 16
      %v354 = vmul.u32 %v350, %v352
      %v355 = vmul.u32 %v350, %v353
      %v356 = vmul.u32 %v351, %v352
      %v357 = vmul.u32 %v351, %v353
      %v358 = vshll.u32 %v355, 16
      %v359 = vshrl.u32 %v355, 16
      %v360 = vshll.u32 %v356, 16
      %v361 = vshrl.u32 %v356, 16
      %vm362 = vc.u32 %v354, %v358
      %v363 = vsel %vm362, 1, 0
      %v364 = vadd.s32 %v354, %v358
      %v365 = vadd.s32 %v357, %v363
      %vm366 = vc.u32 %v364, %v360
      %v367 = vsel %vm366, 1, 0
      %v368 = vadd.s32 %v364, %v360
      %v369 = vadd.s32 %v365, %v367
      %v370 = vadd.s32 %v369, %v359
      %v371 = vadd.s32 %v370, %v361
      %v372 = vmul.u32 %v327, %v318
      %v373 = vadd.s32 %v349, %v368
      %vm374 = vc.u32 %v349, %v368
      %v375 = vadd.s32 %v371, 1
      %v376 = vsel %vm374, %v375, %v371
      %v377 = vadd.s32 %v372, %v376
      %v378 = vadd.s32 %v377, 536870912
      %v379 = vshrl.u32 %v378, 30
      %v380 = vshll.u32 %v379, 30
      %v381 = vsub.s32 %v377, %v380
      %vm382 = vcmp.lt.s32.totalorder %v381, 0
      %v383 = vsub.s32 0, %v381
      %v384 = vsel %vm382, %v383, %v381
      %v385 = vclz %v384
      %v386 = vsub.s32 %v385, 2
      %vm387 = vcmp.gt.s32.totalorder 0, %v386
      %v388 = vsel %vm387, 0, %v386
      %v389 = vsub.s32 32, %v388
      %v390 = vshll.u32 %v381, %v388
      %v391 = vshrl.u32 %v373, %v389
      %v392 = vor.u32 %v390, %v391
      %v393 = vsub.s32 4294967266, %v388
      %v394 = vadd.s32 %v393, 127
      %v395 = vshll.u32 %v394, 23
      %v396 = vor.u32 4788187, %v395
      %v397 = vand.u32 2147483647, %v396
      %v399 = vcvt.s32.f32 %v392
      %v400 = vmul.f32 %v399, %v397
      %v401 = vxor.u32 %v400, 2147483648
      %v402 = vsel %vm281, %v401, %v400
      %v403 = vsub.s32 4, %v379
      %v404 = vsel %vm281, %v403, %v379
      %v405 = vsel %vm280, %v268, %v402
      %v406 = vsel %vm280, 0, %v404
      %v407 = vmul.f32 %v405, %v405
      %v408 = vmul.f32 %v407, -0.001358992
      %v409 = vadd.f32 %v408, 0.041655596
      %v410 = vmul.f32 %v407, %v409
      %v411 = vadd.f32 %v410, -0.4999988
      %v412 = vmul.f32 %v407, %v411
      %v413 = vadd.f32 1.0, %v412
      %v414 = vmul.f32 %v405, %v405
      %v415 = vmul.f32 %v414, -0.00019511016
      %v416 = vadd.f32 %v415, 0.008332121
      %v417 = vmul.f32 %v414, %v416
      %v418 = vadd.f32 %v417, -0.16666654
      %v419 = vmul.f32 %v414, %v418
      %v420 = vadd.f32 %v419, 1.0
      %v421 = vmul.f32 %v420, %v405
      %vm422 = vweird.f32 %v268
      %v423 = vadd.s32 %v406, 3
      %v424 = vand.u32 %v423, 3
      %vm425 = vcmp.lt.s32.totalorder %v424, 2
      %vm426 = vcmp.eq.s32.totalorder %v424, 0
      %v427 = vxor.u32 %v421, 2147483648
      %v428 = vsel %vm426, %v413, %v427
      %vm429 = vcmp.eq.s32.totalorder %v424, 2
      %v430 = vxor.u32 %v413, 2147483648
      %v431 = vsel %vm429, %v430, %v421
      %v432 = vsel %vm425, %v428, %v431
      %v433 = vsel %vm422, nan, %v432
      %v434 = vand.u32 2147483647, %v271
      %vm435 = vcmp.le.f32.partialorder %v434, 0.7853982
      %vm436 = vcmp.lt.s32.totalorder %v271, 0
      %v437 = vand.u32 %v271, 2139095040
      %v438 = vshrl.u32 %v437, 23
      %v439 = vsub.s32 %v438, 127
      %v440 = vand.u32 2147483647, %v271
      %v441 = vand.u32 %v440, 8388607
      %v442 = vor.u32 %v441, 8388608
      %v443 = vsub.s32 0, %v442
      %v444 = vadd.s32 %v439, 1
      %vm445 = vcmp.gt.s32.totalorder %v444, 0
      %v446 = vsel %vm445, %v444, 0
      %v447 = vshrl.u32 %v446, 5
      %v448 = vand.u32 %v446, 31
      %v449 = vsub.s32 32, %v448
      %v450 = vshrl.u32 683565275, %v449
      %v451 = vshll.u32 683565275, %v448
      %v452 = vshrl.u32 2475754826, %v449
      %v453 = vor.u32 %v451, %v452
      %v454 = vshll.u32 2475754826, %v448
      %v455 = vshrl.u32 2131351028, %v449
      %v456 = vor.u32 %v454, %v455
      %v457 = vshll.u32 2131351028, %v448
      %v458 = vshrl.u32 2102212464, %v449
      %v459 = vor.u32 %v457, %v458
      %v460 = vshll.u32 2102212464, %v448
      %v461 = vshrl.u32 920167782, %v449
      %v462 = vor.u32 %v460, %v461
      %v463 = vshll.u32 920167782, %v448
      %v464 = vshrl.u32 1326507024, %v449
      %v465 = vor.u32 %v463, %v464
      %vm466 = vcmp.lt.s32.totalorder %v447, 1
      %vm467 = vcmp.lt.s32.totalorder %v447, 2
      %vm468 = vcmp.lt.s32.totalorder %v447, 3
      %vm469 = vcmp.lt.s32.totalorder %v447, 4
      %v470 = vsel %vm466, %v450, %v453
      %v471 = vsel %vm469, %v459, 2102212464
      %v472 = vsel %vm468, %v456, %v471
      %v473 = vsel %vm467, %v470, %v472
      %v474 = vsel %vm466, %v453, %v456
      %v475 = vsel %vm469, %v462, 920167782
      %v476 = vsel %vm468, %v459, %v475
      %v477 = vsel %vm467, %v474, %v476
      %v478 = vsel %vm466, %v456, %v459
      %v479 = vsel %vm469, %v465, 1326507024
      %v480 = vsel %vm468, %v462, %v479
      %v481 = vsel %vm467, %v478, %v480
      %v482 = vshll.u32 %v442, 8
      %v483 = vand.u32 %v482, 65535
      %v484 = vshrl.u32 %v482, 16
      %v485 = vand.u32 %v481, 65535
      %v486 = vshrl.u32 %v481, 16
      %v487 = vmul.u32 %v483, %v485
      %v488 = vmul.u32 %v483, %v486
      %v489 = vmul.u32 %v484, %v485
      %v490 = vmul.u32 %v484, %v486
      %v491 = vshll.u32 %v488, 16
      %v492 = vshrl.u32 %v488, 16
      %v493 = vshll.u32 %v489, 16
      %v494 = vshrl.u32 %v489, 16
      %vm495 = vc.u32 %v487, %v491
      %v496 = vsel %vm495, 1, 0
      %v497 = vadd.s32 %v487, %v491
      %v498 = vadd.s32 %v490, %v496
      %vm499 = vc.u32 %v497, %v493
      %v500 = vsel %vm499, 1, 0
      %v501 = vadd.s32 %v497, %v493
      %v502 = vadd.s32 %v498, %v500
      %v503 = vadd.s32 %v502, %v492
      %v504 = vadd.s32 %v503, %v494
      %v505 = vand.u32 %v482, 65535
      %v506 = vshrl.u32 %v482, 16
      %v507 = vand.u32 %v477, 65535
      %v508 = vshrl.u32 %v477, 16
      %v509 = vmul.u32 %v505, %v507
      %v510 = vmul.u32 %v505, %v508
      %v511 = vmul.u32 %v506, %v507
      %v512 = vmul.u32 %v506, %v508
      %v513 = vshll.u32 %v510, 16
      %v514 = vshrl.u32 %v510, 16
      %v515 = vshll.u32 %v511, 16
      %v516 = vshrl.u32 %v511, 16
      %vm517 = vc.u32 %v509, %v513
      %v518 = vsel %vm517, 1, 0
      %v519 = vadd.s32 %v509, %v513
      %v520 = vadd.s32 %v512, %v518
      %vm521 = vc.u32 %v519, %v515
      %v522 = vsel %vm521, 1, 0
      %v523 = vadd.s32 %v519, %v515
      %v524 = vadd.s32 %v520, %v522
      %v525 = vadd.s32 %v524, %v514
      %v526 = vadd.s32 %v525, %v516
      %v527 = vmul.u32 %v482, %v473
      %v528 = vadd.s32 %v504, %v523
      %vm529 = vc.u32 %v504, %v523
      %v530 = vadd.s32 %v526, 1
      %v531 = vsel %vm529, %v530, %v526
      %v532 = vadd.s32 %v527, %v531
      %v533 = vadd.s32 %v532, 536870912
      %v534 = vshrl.u32 %v533, 30
      %v535 = vshll.u32 %v534, 30
      %v536 = vsub.s32 %v532, %v535
      %vm537 = vcmp.lt.s32.totalorder %v536, 0
      %v538 = vsub.s32 0, %v536
      %v539 = vsel %vm537, %v538, %v536
      %v540 = vclz %v539
      %v541 = vsub.s32 %v540, 2
      %vm542 = vcmp.gt.s32.totalorder 0, %v541
      %v543 = vsel %vm542, 0, %v541
      %v544 = vsub.s32 32, %v543
      %v545 = vshll.u32 %v536, %v543
      %v546 = vshrl.u32 %v528, %v544
      %v547 = vor.u32 %v545, %v546
      %v548 = vsub.s32 4294967266, %v543
      %v549 = vadd.s32 %v548, 127
      %v550 = vshll.u32 %v549, 23
      %v551 = vor.u32 4788187, %v550
      %v552 = vand.u32 2147483647, %v551
      %v554 = vcvt.s32.f32 %v547
      %v555 = vmul.f32 %v554, %v552
      %v556 = vxor.u32 %v555, 2147483648
      %v557 = vsel %vm436, %v556, %v555
      %v558 = vsub.s32 4, %v534
      %v559 = vsel %vm436, %v558, %v534
      %v560 = vsel %vm435, %v271, %v557
      %v561 = vsel %vm435, 0, %v559
      %v562 = vmul.f32 %v560, %v560
      %v563 = vmul.f32 %v562, -0.001358992
      %v564 = vadd.f32 %v563, 0.041655596
      %v565 = vmul.f32 %v562, %v564
      %v566 = vadd.f32 %v565, -0.4999988
      %v567 = vmul.f32 %v562, %v566
      %v568 = vadd.f32 1.0, %v567
      %v569 = vmul.f32 %v560, %v560
      %v570 = vmul.f32 %v569, -0.00019511016
      %v571 = vadd.f32 %v570, 0.008332121
      %v572 = vmul.f32 %v569, %v571
      %v573 = vadd.f32 %v572, -0.16666654
      %v574 = vmul.f32 %v569, %v573
      %v575 = vadd.f32 %v574, 1.0
      %v576 = vmul.f32 %v575, %v560
      %vm577 = vweird.f32 %v271
      %v578 = vadd.s32 %v561, 3
      %v579 = vand.u32 %v578, 3
      %vm580 = vcmp.lt.s32.totalorder %v579, 2
      %vm581 = vcmp.eq.s32.totalorder %v579, 0
      %v582 = vxor.u32 %v576, 2147483648
      %v583 = vsel %vm581, %v568, %v582
      %vm584 = vcmp.eq.s32.totalorder %v579, 2
      %v585 = vxor.u32 %v568, 2147483648
      %v586 = vsel %vm584, %v585, %v576
      %v587 = vsel %vm580, %v583, %v586
      %v588 = vsel %vm577, nan, %v587
      %v589 = vand.u32 2147483647, %v274
      %vm590 = vcmp.le.f32.partialorder %v589, 0.7853982
      %vm591 = vcmp.lt.s32.totalorder %v274, 0
      %v592 = vand.u32 %v274, 2139095040
      %v593 = vshrl.u32 %v592, 23
      %v594 = vsub.s32 %v593, 127
      %v595 = vand.u32 2147483647, %v274
      %v596 = vand.u32 %v595, 8388607
      %v597 = vor.u32 %v596, 8388608
      %v598 = vsub.s32 0, %v597
      %v599 = vadd.s32 %v594, 1
      %vm600 = vcmp.gt.s32.totalorder %v599, 0
      %v601 = vsel %vm600, %v599, 0
      %v602 = vshrl.u32 %v601, 5
      %v603 = vand.u32 %v601, 31
      %v604 = vsub.s32 32, %v603
      %v605 = vshrl.u32 683565275, %v604
      %v606 = vshll.u32 683565275, %v603
      %v607 = vshrl.u32 2475754826, %v604
      %v608 = vor.u32 %v606, %v607
      %v609 = vshll.u32 2475754826, %v603
      %v610 = vshrl.u32 2131351028, %v604
      %v611 = vor.u32 %v609, %v610
      %v612 = vshll.u32 2131351028, %v603
      %v613 = vshrl.u32 2102212464, %v604
      %v614 = vor.u32 %v612, %v613
      %v615 = vshll.u32 2102212464, %v603
      %v616 = vshrl.u32 920167782, %v604
      %v617 = vor.u32 %v615, %v616
      %v618 = vshll.u32 920167782, %v603
      %v619 = vshrl.u32 1326507024, %v604
      %v620 = vor.u32 %v618, %v619
      %vm621 = vcmp.lt.s32.totalorder %v602, 1
      %vm622 = vcmp.lt.s32.totalorder %v602, 2
      %vm623 = vcmp.lt.s32.totalorder %v602, 3
      %vm624 = vcmp.lt.s32.totalorder %v602, 4
      %v625 = vsel %vm621, %v605, %v608
      %v626 = vsel %vm624, %v614, 2102212464
      %v627 = vsel %vm623, %v611, %v626
      %v628 = vsel %vm622, %v625, %v627
      %v629 = vsel %vm621, %v608, %v611
      %v630 = vsel %vm624, %v617, 920167782
      %v631 = vsel %vm623, %v614, %v630
      %v632 = vsel %vm622, %v629, %v631
      %v633 = vsel %vm621, %v611, %v614
      %v634 = vsel %vm624, %v620, 1326507024
      %v635 = vsel %vm623, %v617, %v634
      %v636 = vsel %vm622, %v633, %v635
      %v637 = vshll.u32 %v597, 8
      %v638 = vand.u32 %v637, 65535
      %v639 = vshrl.u32 %v637, 16
      %v640 = vand.u32 %v636, 65535
      %v641 = vshrl.u32 %v636, 16
      %v642 = vmul.u32 %v638, %v640
      %v643 = vmul.u32 %v638, %v641
      %v644 = vmul.u32 %v639, %v640
      %v645 = vmul.u32 %v639, %v641
      %v646 = vshll.u32 %v643, 16
      %v647 = vshrl.u32 %v643, 16
      %v648 = vshll.u32 %v644, 16
      %v649 = vshrl.u32 %v644, 16
      %vm650 = vc.u32 %v642, %v646
      %v651 = vsel %vm650, 1, 0
      %v652 = vadd.s32 %v642, %v646
      %v653 = vadd.s32 %v645, %v651
      %vm654 = vc.u32 %v652, %v648
      %v655 = vsel %vm654, 1, 0
      %v656 = vadd.s32 %v652, %v648
      %v657 = vadd.s32 %v653, %v655
      %v658 = vadd.s32 %v657, %v647
      %v659 = vadd.s32 %v658, %v649
      %v660 = vand.u32 %v637, 65535
      %v661 = vshrl.u32 %v637, 16
      %v662 = vand.u32 %v632, 65535
      %v663 = vshrl.u32 %v632, 16
      %v664 = vmul.u32 %v660, %v662
      %v665 = vmul.u32 %v660, %v663
      %v666 = vmul.u32 %v661, %v662
      %v667 = vmul.u32 %v661, %v663
      %v668 = vshll.u32 %v665, 16
      %v669 = vshrl.u32 %v665, 16
      %v670 = vshll.u32 %v666, 16
      %v671 = vshrl.u32 %v666, 16
      %vm672 = vc.u32 %v664, %v668
      %v673 = vsel %vm672, 1, 0
      %v674 = vadd.s32 %v664, %v668
      %v675 = vadd.s32 %v667, %v673
      %vm676 = vc.u32 %v674, %v670
      %v677 = vsel %vm676, 1, 0
      %v678 = vadd.s32 %v674, %v670
      %v679 = vadd.s32 %v675, %v677
      %v680 = vadd.s32 %v679, %v669
      %v681 = vadd.s32 %v680, %v671
      %v682 = vmul.u32 %v637, %v628
      %v683 = vadd.s32 %v659, %v678
      %vm684 = vc.u32 %v659, %v678
      %v685 = vadd.s32 %v681, 1
      %v686 = vsel %vm684, %v685, %v681
      %v687 = vadd.s32 %v682, %v686
      %v688 = vadd.s32 %v687, 536870912
      %v689 = vshrl.u32 %v688, 30
      %v690 = vshll.u32 %v689, 30
      %v691 = vsub.s32 %v687, %v690
      %vm692 = vcmp.lt.s32.totalorder %v691, 0
      %v693 = vsub.s32 0, %v691
      %v694 = vsel %vm692, %v693, %v691
      %v695 = vclz %v694
      %v696 = vsub.s32 %v695, 2
      %vm697 = vcmp.gt.s32.totalorder 0, %v696
      %v698 = vsel %vm697, 0, %v696
      %v699 = vsub.s32 32, %v698
      %v700 = vshll.u32 %v691, %v698
      %v701 = vshrl.u32 %v683, %v699
      %v702 = vor.u32 %v700, %v701
      %v703 = vsub.s32 4294967266, %v698
      %v704 = vadd.s32 %v703, 127
      %v705 = vshll.u32 %v704, 23
      %v706 = vor.u32 4788187, %v705
      %v707 = vand.u32 2147483647, %v706
      %v709 = vcvt.s32.f32 %v702
      %v710 = vmul.f32 %v709, %v707
      %v711 = vxor.u32 %v710, 2147483648
      %v712 = vsel %vm591, %v711, %v710
      %v713 = vsub.s32 4, %v689
      %v714 = vsel %vm591, %v713, %v689
      %v715 = vsel %vm590, %v274, %v712
      %v716 = vsel %vm590, 0, %v714
      %v717 = vmul.f32 %v715, %v715
      %v718 = vmul.f32 %v717, -0.001358992
      %v719 = vadd.f32 %v718, 0.041655596
      %v720 = vmul.f32 %v717, %v719
      %v721 = vadd.f32 %v720, -0.4999988
      %v722 = vmul.f32 %v717, %v721
      %v723 = vadd.f32 1.0, %v722
      %v724 = vmul.f32 %v715, %v715
      %v725 = vmul.f32 %v724, -0.00019511016
      %v726 = vadd.f32 %v725, 0.008332121
      %v727 = vmul.f32 %v724, %v726
      %v728 = vadd.f32 %v727, -0.16666654
      %v729 = vmul.f32 %v724, %v728
      %v730 = vadd.f32 %v729, 1.0
      %v731 = vmul.f32 %v730, %v715
      %vm732 = vweird.f32 %v274
      %v733 = vadd.s32 %v716, 3
      %v734 = vand.u32 %v733, 3
      %vm735 = vcmp.lt.s32.totalorder %v734, 2
      %vm736 = vcmp.eq.s32.totalorder %v734, 0
      %v737 = vxor.u32 %v731, 2147483648
      %v738 = vsel %vm736, %v723, %v737
      %vm739 = vcmp.eq.s32.totalorder %v734, 2
      %v740 = vxor.u32 %v723, 2147483648
      %v741 = vsel %vm739, %v740, %v731
      %v742 = vsel %vm735, %v738, %v741
      %v743 = vsel %vm732, nan, %v742
      %v744 = vand.u32 2147483647, %v277
      %vm745 = vcmp.le.f32.partialorder %v744, 0.7853982
      %vm746 = vcmp.lt.s32.totalorder %v277, 0
      %v747 = vand.u32 %v277, 2139095040
      %v748 = vshrl.u32 %v747, 23
      %v749 = vsub.s32 %v748, 127
      %v750 = vand.u32 2147483647, %v277
      %v751 = vand.u32 %v750, 8388607
      %v752 = vor.u32 %v751, 8388608
      %v753 = vsub.s32 0, %v752
      %v754 = vadd.s32 %v749, 1
      %vm755 = vcmp.gt.s32.totalorder %v754, 0
      %v756 = vsel %vm755, %v754, 0
      %v757 = vshrl.u32 %v756, 5
      %v758 = vand.u32 %v756, 31
      %v759 = vsub.s32 32, %v758
      %v760 = vshrl.u32 683565275, %v759
      %v761 = vshll.u32 683565275, %v758
      %v762 = vshrl.u32 2475754826, %v759
      %v763 = vor.u32 %v761, %v762
      %v764 = vshll.u32 2475754826, %v758
      %v765 = vshrl.u32 2131351028, %v759
      %v766 = vor.u32 %v764, %v765
      %v767 = vshll.u32 2131351028, %v758
      %v768 = vshrl.u32 2102212464, %v759
      %v769 = vor.u32 %v767, %v768
      %v770 = vshll.u32 2102212464, %v758
      %v771 = vshrl.u32 920167782, %v759
      %v772 = vor.u32 %v770, %v771
      %v773 = vshll.u32 920167782, %v758
      %v774 = vshrl.u32 1326507024, %v759
      %v775 = vor.u32 %v773, %v774
      %vm776 = vcmp.lt.s32.totalorder %v757, 1
      %vm777 = vcmp.lt.s32.totalorder %v757, 2
      %vm778 = vcmp.lt.s32.totalorder %v757, 3
      %vm779 = vcmp.lt.s32.totalorder %v757, 4
      %v780 = vsel %vm776, %v760, %v763
      %v781 = vsel %vm779, %v769, 2102212464
      %v782 = vsel %vm778, %v766, %v781
      %v783 = vsel %vm777, %v780, %v782
      %v784 = vsel %vm776, %v763, %v766
      %v785 = vsel %vm779, %v772, 920167782
      %v786 = vsel %vm778, %v769, %v785
      %v787 = vsel %vm777, %v784, %v786
      %v788 = vsel %vm776, %v766, %v769
      %v789 = vsel %vm779, %v775, 1326507024
      %v790 = vsel %vm778, %v772, %v789
      %v791 = vsel %vm777, %v788, %v790
      %v792 = vshll.u32 %v752, 8
      %v793 = vand.u32 %v792, 65535
      %v794 = vshrl.u32 %v792, 16
      %v795 = vand.u32 %v791, 65535
      %v796 = vshrl.u32 %v791, 16
      %v797 = vmul.u32 %v793, %v795
      %v798 = vmul.u32 %v793, %v796
      %v799 = vmul.u32 %v794, %v795
      %v800 = vmul.u32 %v794, %v796
      %v801 = vshll.u32 %v798, 16
      %v802 = vshrl.u32 %v798, 16
      %v803 = vshll.u32 %v799, 16
      %v804 = vshrl.u32 %v799, 16
      %vm805 = vc.u32 %v797, %v801
      %v806 = vsel %vm805, 1, 0
      %v807 = vadd.s32 %v797, %v801
      %v808 = vadd.s32 %v800, %v806
      %vm809 = vc.u32 %v807, %v803
      %v810 = vsel %vm809, 1, 0
      %v811 = vadd.s32 %v807, %v803
      %v812 = vadd.s32 %v808, %v810
      %v813 = vadd.s32 %v812, %v802
      %v814 = vadd.s32 %v813, %v804
      %v815 = vand.u32 %v792, 65535
      %v816 = vshrl.u32 %v792, 16
      %v817 = vand.u32 %v787, 65535
      %v818 = vshrl.u32 %v787, 16
      %v819 = vmul.u32 %v815, %v817
      %v820 = vmul.u32 %v815, %v818
      %v821 = vmul.u32 %v816, %v817
      %v822 = vmul.u32 %v816, %v818
      %v823 = vshll.u32 %v820, 16
      %v824 = vshrl.u32 %v820, 16
      %v825 = vshll.u32 %v821, 16
      %v826 = vshrl.u32 %v821, 16
      %vm827 = vc.u32 %v819, %v823
      %v828 = vsel %vm827, 1, 0
      %v829 = vadd.s32 %v819, %v823
      %v830 = vadd.s32 %v822, %v828
      %vm831 = vc.u32 %v829, %v825
      %v832 = vsel %vm831, 1, 0
      %v833 = vadd.s32 %v829, %v825
      %v834 = vadd.s32 %v830, %v832
      %v835 = vadd.s32 %v834, %v824
      %v836 = vadd.s32 %v835, %v826
      %v837 = vmul.u32 %v792, %v783
      %v838 = vadd.s32 %v814, %v833
      %vm839 = vc.u32 %v814, %v833
      %v840 = vadd.s32 %v836, 1
      %v841 = vsel %vm839, %v840, %v836
      %v842 = vadd.s32 %v837, %v841
      %v843 = vadd.s32 %v842, 536870912
      %v844 = vshrl.u32 %v843, 30
      %v845 = vshll.u32 %v844, 30
      %v846 = vsub.s32 %v842, %v845
      %vm847 = vcmp.lt.s32.totalorder %v846, 0
      %v848 = vsub.s32 0, %v846
      %v849 = vsel %vm847, %v848, %v846
      %v850 = vclz %v849
      %v851 = vsub.s32 %v850, 2
      %vm852 = vcmp.gt.s32.totalorder 0, %v851
      %v853 = vsel %vm852, 0, %v851
      %v854 = vsub.s32 32, %v853
      %v855 = vshll.u32 %v846, %v853
      %v856 = vshrl.u32 %v838, %v854
      %v857 = vor.u32 %v855, %v856
      %v858 = vsub.s32 4294967266, %v853
      %v859 = vadd.s32 %v858, 127
      %v860 = vshll.u32 %v859, 23
      %v861 = vor.u32 4788187, %v860
      %v862 = vand.u32 2147483647, %v861
      %v864 = vcvt.s32.f32 %v857
      %v865 = vmul.f32 %v864, %v862
      %v866 = vxor.u32 %v865, 2147483648
      %v867 = vsel %vm746, %v866, %v865
      %v868 = vsub.s32 4, %v844
      %v869 = vsel %vm746, %v868, %v844
      %v870 = vsel %vm745, %v277, %v867
      %v871 = vsel %vm745, 0, %v869
      %v872 = vmul.f32 %v870, %v870
      %v873 = vmul.f32 %v872, -0.001358992
      %v874 = vadd.f32 %v873, 0.041655596
      %v875 = vmul.f32 %v872, %v874
      %v876 = vadd.f32 %v875, -0.4999988
      %v877 = vmul.f32 %v872, %v876
      %v878 = vadd.f32 1.0, %v877
      %v879 = vmul.f32 %v870, %v870
      %v880 = vmul.f32 %v879, -0.00019511016
      %v881 = vadd.f32 %v880, 0.008332121
      %v882 = vmul.f32 %v879, %v881
      %v883 = vadd.f32 %v882, -0.16666654
      %v884 = vmul.f32 %v879, %v883
      %v885 = vadd.f32 %v884, 1.0
      %v886 = vmul.f32 %v885, %v870
      %vm887 = vweird.f32 %v277
      %v888 = vadd.s32 %v871, 3
      %v889 = vand.u32 %v888, 3
      %vm890 = vcmp.lt.s32.totalorder %v889, 2
      %vm891 = vcmp.eq.s32.totalorder %v889, 0
      %v892 = vxor.u32 %v886, 2147483648
      %v893 = vsel %vm891, %v878, %v892
      %vm894 = vcmp.eq.s32.totalorder %v889, 2
      %v895 = vxor.u32 %v878, 2147483648
      %v896 = vsel %vm894, %v895, %v886
      %v897 = vsel %vm890, %v893, %v896
      %v898 = vsel %vm887, nan, %v897
      %899 = vst.msk [vmem:[%s223] sm:$0xff] %vm237, %v433
      %900 = vst.msk [vmem:[%s223 + $0x8] sm:$0xff] %vm237, %v588
      %901 = vst.msk [vmem:[%s223 + $0x10] sm:$0xff] %vm237, %v743
      %902 = vst.msk [vmem:[%s223 + $0x18] sm:$0xff] %vm237, %v898
      %s903 = smul.u32 4, %s18
      %p904 = scmp.lt.s32.totalorder %s903, 7
      %s905 = scalar_select %p904, %s903, 7
      %p906 = scmp.lt.s32.totalorder %s19, 0
      %s907 = scalar_select %p906, %s19, 0
      %s908 = sadd.s32 %s907, %s905
      %s909 = smul.addr %s908, 8
      %s910 = scalar_lea.vmem %s3, %s909
      // Predicated region
      $region33: #{tpu_custom_call.1} parent=31 // pred_check
        %p911 = pneg %p124
      $region34: #{tpu_custom_call.1} parent=31 // pred_check_branch
        %913 = sbr.rel (%p911) target = $region36
      $region35: #{tpu_custom_call.1} parent=31 // pred_region
        %s914 = smul.u32 4, %s18
      $region36: #{tpu_custom_call.1} parent=31 // pred_fallthru
        _
    $region32: #{tpu_custom_call.1} parent=5 // pred_fallthru
      _
    %p915 = scmp.le.s32.totalorder 2, %s9
    // Predicated region
    $region37: #{tpu_custom_call.1} parent=5 // pred_check
      %p916 = pneg %p915
    $region38: #{tpu_custom_call.1} parent=5 // pred_check_branch
      %918 = sbr.rel (%p916) target = $region40
    $region39: #{tpu_custom_call.1} parent=5 // pred_region
      %s919 = ssub.s32 %s9, 2
      // Predicated region
      $region41: #{tpu_custom_call.1} parent=39 // pred_check
        %p920 = pneg %p130
      $region42: #{tpu_custom_call.1} parent=39 // pred_check_branch
        %922 = sbr.rel (%p920) target = $region44
      $region43: #{tpu_custom_call.1} parent=39 // pred_region
        %s923 = smul.u32 4, %s20
        %p924 = scmp.lt.s32.totalorder %s923, 7
        %s925 = scalar_select %p924, %s923, 7
        %p926 = scmp.lt.s32.totalorder %s21, 0
        %s927 = scalar_select %p926, %s21, 0
        %s928 = sadd.s32 %s927, %s925
        %s929 = smul.addr %s928, 8
        %s930 = scalar_lea.vmem %s3, %s929
      $region44: #{tpu_custom_call.1} parent=39 // pred_fallthru
        _
    $region40: #{tpu_custom_call.1} parent=5 // pred_fallthru
      _
  $region6: #{tpu_custom_call.1} parent=0 // loop_footer
    %s13 = sadd.s32 1, %s9
  $region7: #{tpu_custom_call.1} parent=0 // loop_footer_branch
    %8 = sbr.rel target = $region3
  $region8: #{tpu_custom_call.1} parent=0 // loop_exit
    _

</llo_original>
